<compile_context>
chip_gen: v6e
topology: v6e:2x2x1
jax: 0.10.0
libtpu: 0.0.40
codegen_flags: <defaults>
</compile_context>

<pallas_src>
from functools import partial

import numpy as np
import jax
import jax.numpy as jnp
from jax.experimental import pallas as pl
from jax.experimental.pallas import tpu as pltpu


# ---------------------------------------------------------------------------
# Host-side construction of the per-level separable operators (static shapes).
# ---------------------------------------------------------------------------
def _interp_matrix(out_s: int, in_s: int) -> np.ndarray:
    """1-D bilinear resample matrix M (out_s, in_s), align_corners=True
    (matches F.interpolate(..., mode='bilinear', align_corners=True))."""
    M = np.zeros((out_s, in_s), np.float64)
    if out_s == 1:
        M[0, 0] = 1.0
        return M
    scale = (in_s - 1) / (out_s - 1)
    for o in range(out_s):
        src = o * scale
        lo = min(max(int(np.floor(src)), 0), in_s - 1)
        hi = min(lo + 1, in_s - 1)
        frac = src - lo
        M[o, lo] += 1.0 - frac
        M[o, hi] += frac
    return M


def _lap1d_matrix(n: int) -> np.ndarray:
    """1-D second-difference with zero padding: tridiag(-1, 2, -1)."""
    A = 2.0 * np.eye(n, dtype=np.float64)
    if n > 1:
        i = np.arange(n - 1)
        A[i, i + 1] = -1.0
        A[i + 1, i] = -1.0
    return A


def _build_level_operators(H: int, W: int):
    """Per pyramid level k: lap_full_k = PA_k @ X @ QIt_k + PI_k @ X @ QAt_k."""
    sizes = [(H // 8, W // 8), (H // 4, W // 4), (H // 2, W // 2), (H, W)]
    pa, pi, qit, qat = [], [], [], []
    for h, w in sizes:
        Dh = _interp_matrix(h, H)          # downsample rows    (h, H)
        Dw = _interp_matrix(w, W)          # downsample cols    (w, W)
        Uh = _interp_matrix(H, h)          # upsample rows      (H, h)
        Uw = _interp_matrix(W, w)          # upsample cols      (W, w)
        Ah = _lap1d_matrix(h)              # vertical Laplacian (h, h)
        Aw = _lap1d_matrix(w)              # horizontal Laplacian (w, w)
        pa.append(Uh @ Ah @ Dh)            # (H, H)
        pi.append(Uh @ Dh)                 # (H, H)
        qit.append((Uw @ Dw).T)            # (W, W)  (transpose pre-applied)
        qat.append((Uw @ Aw @ Dw).T)       # (W, W)
    to_f32 = lambda ms: jnp.asarray(np.stack(ms).astype(np.float32))
    return to_f32(pa), to_f32(pi), to_f32(qit), to_f32(qat)


# ---------------------------------------------------------------------------
# Pallas kernel: all 4 pyramid levels for one (batch, channel) image tile.
# ---------------------------------------------------------------------------
def _lap_pyramid_kernel(pa_ref, pi_ref, qit_ref, qat_ref, x_ref, o_ref):
    x = x_ref[0, 0]                                   # (H, W) f32
    for lvl in range(4):                              # static unroll, 4 levels
        left = jnp.dot(pa_ref[lvl], x, preferred_element_type=jnp.float32)
        right = jnp.dot(pi_ref[lvl], x, preferred_element_type=jnp.float32)
        o_ref[0, lvl, 0] = (
            jnp.dot(left, qit_ref[lvl], preferred_element_type=jnp.float32)
            + jnp.dot(right, qat_ref[lvl], preferred_element_type=jnp.float32))


@jax.jit
def laplacian_pyramid(x):
    """x: (B, C, H, W) f32, NCHW.  Returns (B, 4*C, H, W)."""
    B, C, H, W = x.shape
    assert H % 8 == 0 and W % 8 == 0, "spatial dims must be multiples of 8"
    PA, PI, QIt, QAt = _build_level_operators(H, W)   # (4,H,H)/(4,W,W) consts

    out5 = pl.pallas_call(
        _lap_pyramid_kernel,
        out_shape=jax.ShapeDtypeStruct((B, 4, C, H, W), jnp.float32),
        grid_spec=pltpu.PrefetchScalarGridSpec(
            num_scalar_prefetch=0,
            grid=(B, C),
            in_specs=[
                pl.BlockSpec((4, H, H), lambda b, c: (0, 0, 0)),   # PA (resident)
                pl.BlockSpec((4, H, H), lambda b, c: (0, 0, 0)),   # PI (resident)
                pl.BlockSpec((4, W, W), lambda b, c: (0, 0, 0)),   # QIt (resident)
                pl.BlockSpec((4, W, W), lambda b, c: (0, 0, 0)),   # QAt (resident)
                pl.BlockSpec((1, 1, H, W), lambda b, c: (b, c, 0, 0)),  # x tile
            ],
            out_specs=pl.BlockSpec((1, 4, 1, H, W),
                                   lambda b, c: (b, 0, c, 0, 0)),
        ),
        compiler_params=pltpu.CompilerParams(
            dimension_semantics=("parallel", "parallel")),
    )(PA, PI, QIt, QAt, x)

    # (B, 4, C, H, W) -> (B, 4*C, H, W): level-major channel order == torch.cat.
    return out5.reshape(B, 4 * C, H, W)


# ---------------------------------------------------------------------------
# Plain-JAX reference (direct resize + stencil) for a numerical self-check.
# ---------------------------------------------------------------------------
def _resize_ref(x, out_h, out_w):
    B, C, H, W = x.shape

    def coords(in_s, out_s):
        if out_s == 1:
            src = np.zeros((1,), np.float64)
        else:
            src = np.arange(out_s, dtype=np.float64) * ((in_s - 1) / (out_s - 1))
        lo = np.clip(np.floor(src).astype(np.int64), 0, in_s - 1)
        hi = np.minimum(lo + 1, in_s - 1)
        frac = (src - lo).astype(np.float32)
        return lo, hi, frac

    hl, hh, hf = coords(H, out_h)
    wl, wh, wf = coords(W, out_w)
    top, bot = x[:, :, hl, :], x[:, :, hh, :]
    xv = top * (1.0 - hf)[None, None, :, None] + bot * hf[None, None, :, None]
    lt, rt = xv[:, :, :, wl], xv[:, :, :, wh]
    return lt * (1.0 - wf)[None, None, None, :] + rt * wf[None, None, None, :]


def _lap_ref(x):
    xp = jnp.pad(x, ((0, 0), (0, 0), (1, 1), (1, 1)))
    return (4.0 * xp[:, :, 1:-1, 1:-1]
            - xp[:, :, :-2, 1:-1] - xp[:, :, 2:, 1:-1]
            - xp[:, :, 1:-1, :-2] - xp[:, :, 1:-1, 2:])


def laplacian_pyramid_ref(x):
    B, C, H, W = x.shape
    x0 = _resize_ref(x, H // 8, W // 8)
    x1 = _resize_ref(x, H // 4, W // 4)
    x2 = _resize_ref(x, H // 2, W // 2)
    l0 = _resize_ref(_lap_ref(x0), H, W)
    l1 = _resize_ref(_lap_ref(x1), H, W)
    l2 = _resize_ref(_lap_ref(x2), H, W)
    l3 = _lap_ref(x)
    return jnp.concatenate([l0, l1, l2, l3], axis=1)


# ---------------------------------------------------------------------------
if __name__ == "__main__":
    key = jax.random.PRNGKey(0)
    B, C, H, W = 2, 3, 16, 16          # dim=3 (module default), spatial 16
    x = jax.random.uniform(key, (B, C, H, W), dtype=jnp.float32)

    out = laplacian_pyramid(x)
    out = jax.block_until_ready(out)
    assert out.shape == (B, 4 * C, H, W)
    assert bool(jnp.all(jnp.isfinite(out)))

    ref = laplacian_pyramid_ref(x)
    err = float(jnp.max(jnp.abs(out - ref)))
    assert np.isfinite(err) and err < 3e-2, f"max abs err {err}"

    print("KERNEL_OK")
</pallas_src>

<mosaic_0001>
module attributes {stable_mosaic.version = 11 : i64} {
  func.func @_lap_pyramid_kernel(%arg0: i32, %arg1: i32, %arg2: memref<4x16x16xf32, #tpu.memory_space<vmem>>, %arg3: memref<4x16x16xf32, #tpu.memory_space<vmem>>, %arg4: memref<4x16x16xf32, #tpu.memory_space<vmem>>, %arg5: memref<4x16x16xf32, #tpu.memory_space<vmem>>, %arg6: memref<1x1x16x16xf32, #tpu.memory_space<vmem>>, %arg7: memref<1x4x1x16x16xf32, #tpu.memory_space<vmem>>) attributes {dimension_semantics = [#tpu.dimension_semantics<parallel>, #tpu.dimension_semantics<parallel>], iteration_bounds = array<i64: 2, 3>, scalar_prefetch = 0 : i64, scratch_operands = 0 : i64, tpu.core_type = #tpu.core_type<tc>, window_params = [{pipeline_mode = #tpu.pipeline_mode<synchronous>, transform_indices = @transform_0, window_bounds = array<i64: 4, 16, 16>}, {pipeline_mode = #tpu.pipeline_mode<synchronous>, transform_indices = @transform_1, window_bounds = array<i64: 4, 16, 16>}, {pipeline_mode = #tpu.pipeline_mode<synchronous>, transform_indices = @transform_2, window_bounds = array<i64: 4, 16, 16>}, {pipeline_mode = #tpu.pipeline_mode<synchronous>, transform_indices = @transform_3, window_bounds = array<i64: 4, 16, 16>}, {transform_indices = @transform_4, window_bounds = array<i64: 1, 1, 16, 16>}, {transform_indices = @transform_5, window_bounds = array<i64: 1, 4, 1, 16, 16>}]} {
    %c0 = arith.constant 0 : index
    %c0_0 = arith.constant 0 : index
    %c0_1 = arith.constant 0 : index
    %c0_2 = arith.constant 0 : index
    %0 = vector.load %arg6[%c0, %c0_0, %c0_1, %c0_2] : memref<1x1x16x16xf32, #tpu.memory_space<vmem>>, vector<1x1x16x16xf32>
    %1 = vector.shape_cast %0 : vector<1x1x16x16xf32> to vector<16x16xf32>
    %c0_3 = arith.constant 0 : index
    %c0_4 = arith.constant 0 : index
    %c0_5 = arith.constant 0 : index
    %2 = vector.load %arg2[%c0_3, %c0_4, %c0_5] : memref<4x16x16xf32, #tpu.memory_space<vmem>>, vector<1x16x16xf32>
    %3 = vector.shape_cast %2 : vector<1x16x16xf32> to vector<16x16xf32>
    %cst = arith.constant dense<0.000000e+00> : vector<16x16xf32>
    %4 = tpu.matmul %3, %1, %cst {dimension_numbers = #tpu.dot_dimension_numbers<[1], [0], [0], [1], [0, 0, 1, 1], [], []>} : vector<16x16xf32>, vector<16x16xf32>, vector<16x16xf32> -> vector<16x16xf32>
    %c0_6 = arith.constant 0 : index
    %c0_7 = arith.constant 0 : index
    %c0_8 = arith.constant 0 : index
    %5 = vector.load %arg3[%c0_6, %c0_7, %c0_8] : memref<4x16x16xf32, #tpu.memory_space<vmem>>, vector<1x16x16xf32>
    %6 = vector.shape_cast %5 : vector<1x16x16xf32> to vector<16x16xf32>
    %cst_9 = arith.constant dense<0.000000e+00> : vector<16x16xf32>
    %7 = tpu.matmul %6, %1, %cst_9 {dimension_numbers = #tpu.dot_dimension_numbers<[1], [0], [0], [1], [0, 0, 1, 1], [], []>} : vector<16x16xf32>, vector<16x16xf32>, vector<16x16xf32> -> vector<16x16xf32>
    %c0_10 = arith.constant 0 : index
    %c0_11 = arith.constant 0 : index
    %c0_12 = arith.constant 0 : index
    %8 = vector.load %arg4[%c0_10, %c0_11, %c0_12] : memref<4x16x16xf32, #tpu.memory_space<vmem>>, vector<1x16x16xf32>
    %9 = vector.shape_cast %8 : vector<1x16x16xf32> to vector<16x16xf32>
    %cst_13 = arith.constant dense<0.000000e+00> : vector<16x16xf32>
    %10 = tpu.matmul %4, %9, %cst_13 {dimension_numbers = #tpu.dot_dimension_numbers<[1], [0], [0], [1], [0, 0, 1, 1], [], []>} : vector<16x16xf32>, vector<16x16xf32>, vector<16x16xf32> -> vector<16x16xf32>
    %c0_14 = arith.constant 0 : index
    %c0_15 = arith.constant 0 : index
    %c0_16 = arith.constant 0 : index
    %11 = vector.load %arg5[%c0_14, %c0_15, %c0_16] : memref<4x16x16xf32, #tpu.memory_space<vmem>>, vector<1x16x16xf32>
    %12 = vector.shape_cast %11 : vector<1x16x16xf32> to vector<16x16xf32>
    %cst_17 = arith.constant dense<0.000000e+00> : vector<16x16xf32>
    %13 = tpu.matmul %7, %12, %cst_17 {dimension_numbers = #tpu.dot_dimension_numbers<[1], [0], [0], [1], [0, 0, 1, 1], [], []>} : vector<16x16xf32>, vector<16x16xf32>, vector<16x16xf32> -> vector<16x16xf32>
    %14 = arith.addf %10, %13 : vector<16x16xf32>
    %c0_18 = arith.constant 0 : index
    %c0_19 = arith.constant 0 : index
    %c0_20 = arith.constant 0 : index
    %c0_21 = arith.constant 0 : index
    %c0_22 = arith.constant 0 : index
    %15 = vector.load %arg7[%c0_18, %c0_19, %c0_20, %c0_21, %c0_22] : memref<1x4x1x16x16xf32, #tpu.memory_space<vmem>>, vector<1x1x1x16x16xf32>
    %16 = vector.shape_cast %15 : vector<1x1x1x16x16xf32> to vector<16x16xf32>
    %17 = vector.shape_cast %14 : vector<16x16xf32> to vector<1x1x1x16x16xf32>
    tpu.vector_store %arg7[%c0_18, %c0_19, %c0_20, %c0_21, %c0_22], %17 {strides = array<i32>} : memref<1x4x1x16x16xf32, #tpu.memory_space<vmem>>, vector<1x1x1x16x16xf32>,
    %c1 = arith.constant 1 : index
    %c0_23 = arith.constant 0 : index
    %c0_24 = arith.constant 0 : index
    %18 = vector.load %arg2[%c1, %c0_23, %c0_24] : memref<4x16x16xf32, #tpu.memory_space<vmem>>, vector<1x16x16xf32>
    %19 = vector.shape_cast %18 : vector<1x16x16xf32> to vector<16x16xf32>
    %cst_25 = arith.constant dense<0.000000e+00> : vector<16x16xf32>
    %20 = tpu.matmul %19, %1, %cst_25 {dimension_numbers = #tpu.dot_dimension_numbers<[1], [0], [0], [1], [0, 0, 1, 1], [], []>} : vector<16x16xf32>, vector<16x16xf32>, vector<16x16xf32> -> vector<16x16xf32>
    %c1_26 = arith.constant 1 : index
    %c0_27 = arith.constant 0 : index
    %c0_28 = arith.constant 0 : index
    %21 = vector.load %arg3[%c1_26, %c0_27, %c0_28] : memref<4x16x16xf32, #tpu.memory_space<vmem>>, vector<1x16x16xf32>
    %22 = vector.shape_cast %21 : vector<1x16x16xf32> to vector<16x16xf32>
    %cst_29 = arith.constant dense<0.000000e+00> : vector<16x16xf32>
    %23 = tpu.matmul %22, %1, %cst_29 {dimension_numbers = #tpu.dot_dimension_numbers<[1], [0], [0], [1], [0, 0, 1, 1], [], []>} : vector<16x16xf32>, vector<16x16xf32>, vector<16x16xf32> -> vector<16x16xf32>
    %c1_30 = arith.constant 1 : index
    %c0_31 = arith.constant 0 : index
    %c0_32 = arith.constant 0 : index
    %24 = vector.load %arg4[%c1_30, %c0_31, %c0_32] : memref<4x16x16xf32, #tpu.memory_space<vmem>>, vector<1x16x16xf32>
    %25 = vector.shape_cast %24 : vector<1x16x16xf32> to vector<16x16xf32>
    %cst_33 = arith.constant dense<0.000000e+00> : vector<16x16xf32>
    %26 = tpu.matmul %20, %25, %cst_33 {dimension_numbers = #tpu.dot_dimension_numbers<[1], [0], [0], [1], [0, 0, 1, 1], [], []>} : vector<16x16xf32>, vector<16x16xf32>, vector<16x16xf32> -> vector<16x16xf32>
    %c1_34 = arith.constant 1 : index
    %c0_35 = arith.constant 0 : index
    %c0_36 = arith.constant 0 : index
    %27 = vector.load %arg5[%c1_34, %c0_35, %c0_36] : memref<4x16x16xf32, #tpu.memory_space<vmem>>, vector<1x16x16xf32>
    %28 = vector.shape_cast %27 : vector<1x16x16xf32> to vector<16x16xf32>
    %cst_37 = arith.constant dense<0.000000e+00> : vector<16x16xf32>
    %29 = tpu.matmul %23, %28, %cst_37 {dimension_numbers = #tpu.dot_dimension_numbers<[1], [0], [0], [1], [0, 0, 1, 1], [], []>} : vector<16x16xf32>, vector<16x16xf32>, vector<16x16xf32> -> vector<16x16xf32>
    %30 = arith.addf %26, %29 : vector<16x16xf32>
    %c0_38 = arith.constant 0 : index
    %c1_39 = arith.constant 1 : index
    %c0_40 = arith.constant 0 : index
    %c0_41 = arith.constant 0 : index
    %c0_42 = arith.constant 0 : index
    %31 = vector.load %arg7[%c0_38, %c1_39, %c0_40, %c0_41, %c0_42] : memref<1x4x1x16x16xf32, #tpu.memory_space<vmem>>, vector<1x1x1x16x16xf32>
    %32 = vector.shape_cast %31 : vector<1x1x1x16x16xf32> to vector<16x16xf32>
    %33 = vector.shape_cast %30 : vector<16x16xf32> to vector<1x1x1x16x16xf32>
    tpu.vector_store %arg7[%c0_38, %c1_39, %c0_40, %c0_41, %c0_42], %33 {strides = array<i32>} : memref<1x4x1x16x16xf32, #tpu.memory_space<vmem>>, vector<1x1x1x16x16xf32>,
    %c2 = arith.constant 2 : index
    %c0_43 = arith.constant 0 : index
    %c0_44 = arith.constant 0 : index
    %34 = vector.load %arg2[%c2, %c0_43, %c0_44] : memref<4x16x16xf32, #tpu.memory_space<vmem>>, vector<1x16x16xf32>
    %35 = vector.shape_cast %34 : vector<1x16x16xf32> to vector<16x16xf32>
    %cst_45 = arith.constant dense<0.000000e+00> : vector<16x16xf32>
    %36 = tpu.matmul %35, %1, %cst_45 {dimension_numbers = #tpu.dot_dimension_numbers<[1], [0], [0], [1], [0, 0, 1, 1], [], []>} : vector<16x16xf32>, vector<16x16xf32>, vector<16x16xf32> -> vector<16x16xf32>
    %c2_46 = arith.constant 2 : index
    %c0_47 = arith.constant 0 : index
    %c0_48 = arith.constant 0 : index
    %37 = vector.load %arg3[%c2_46, %c0_47, %c0_48] : memref<4x16x16xf32, #tpu.memory_space<vmem>>, vector<1x16x16xf32>
    %38 = vector.shape_cast %37 : vector<1x16x16xf32> to vector<16x16xf32>
    %cst_49 = arith.constant dense<0.000000e+00> : vector<16x16xf32>
    %39 = tpu.matmul %38, %1, %cst_49 {dimension_numbers = #tpu.dot_dimension_numbers<[1], [0], [0], [1], [0, 0, 1, 1], [], []>} : vector<16x16xf32>, vector<16x16xf32>, vector<16x16xf32> -> vector<16x16xf32>
    %c2_50 = arith.constant 2 : index
    %c0_51 = arith.constant 0 : index
    %c0_52 = arith.constant 0 : index
    %40 = vector.load %arg4[%c2_50, %c0_51, %c0_52] : memref<4x16x16xf32, #tpu.memory_space<vmem>>, vector<1x16x16xf32>
    %41 = vector.shape_cast %40 : vector<1x16x16xf32> to vector<16x16xf32>
    %cst_53 = arith.constant dense<0.000000e+00> : vector<16x16xf32>
    %42 = tpu.matmul %36, %41, %cst_53 {dimension_numbers = #tpu.dot_dimension_numbers<[1], [0], [0], [1], [0, 0, 1, 1], [], []>} : vector<16x16xf32>, vector<16x16xf32>, vector<16x16xf32> -> vector<16x16xf32>
    %c2_54 = arith.constant 2 : index
    %c0_55 = arith.constant 0 : index
    %c0_56 = arith.constant 0 : index
    %43 = vector.load %arg5[%c2_54, %c0_55, %c0_56] : memref<4x16x16xf32, #tpu.memory_space<vmem>>, vector<1x16x16xf32>
    %44 = vector.shape_cast %43 : vector<1x16x16xf32> to vector<16x16xf32>
    %cst_57 = arith.constant dense<0.000000e+00> : vector<16x16xf32>
    %45 = tpu.matmul %39, %44, %cst_57 {dimension_numbers = #tpu.dot_dimension_numbers<[1], [0], [0], [1], [0, 0, 1, 1], [], []>} : vector<16x16xf32>, vector<16x16xf32>, vector<16x16xf32> -> vector<16x16xf32>
    %46 = arith.addf %42, %45 : vector<16x16xf32>
    %c0_58 = arith.constant 0 : index
    %c2_59 = arith.constant 2 : index
    %c0_60 = arith.constant 0 : index
    %c0_61 = arith.constant 0 : index
    %c0_62 = arith.constant 0 : index
    %47 = vector.load %arg7[%c0_58, %c2_59, %c0_60, %c0_61, %c0_62] : memref<1x4x1x16x16xf32, #tpu.memory_space<vmem>>, vector<1x1x1x16x16xf32>
    %48 = vector.shape_cast %47 : vector<1x1x1x16x16xf32> to vector<16x16xf32>
    %49 = vector.shape_cast %46 : vector<16x16xf32> to vector<1x1x1x16x16xf32>
    tpu.vector_store %arg7[%c0_58, %c2_59, %c0_60, %c0_61, %c0_62], %49 {strides = array<i32>} : memref<1x4x1x16x16xf32, #tpu.memory_space<vmem>>, vector<1x1x1x16x16xf32>,
    %c3 = arith.constant 3 : index
    %c0_63 = arith.constant 0 : index
    %c0_64 = arith.constant 0 : index
    %50 = vector.load %arg2[%c3, %c0_63, %c0_64] : memref<4x16x16xf32, #tpu.memory_space<vmem>>, vector<1x16x16xf32>
    %51 = vector.shape_cast %50 : vector<1x16x16xf32> to vector<16x16xf32>
    %cst_65 = arith.constant dense<0.000000e+00> : vector<16x16xf32>
    %52 = tpu.matmul %51, %1, %cst_65 {dimension_numbers = #tpu.dot_dimension_numbers<[1], [0], [0], [1], [0, 0, 1, 1], [], []>} : vector<16x16xf32>, vector<16x16xf32>, vector<16x16xf32> -> vector<16x16xf32>
    %c3_66 = arith.constant 3 : index
    %c0_67 = arith.constant 0 : index
    %c0_68 = arith.constant 0 : index
    %53 = vector.load %arg3[%c3_66, %c0_67, %c0_68] : memref<4x16x16xf32, #tpu.memory_space<vmem>>, vector<1x16x16xf32>
    %54 = vector.shape_cast %53 : vector<1x16x16xf32> to vector<16x16xf32>
    %cst_69 = arith.constant dense<0.000000e+00> : vector<16x16xf32>
    %55 = tpu.matmul %54, %1, %cst_69 {dimension_numbers = #tpu.dot_dimension_numbers<[1], [0], [0], [1], [0, 0, 1, 1], [], []>} : vector<16x16xf32>, vector<16x16xf32>, vector<16x16xf32> -> vector<16x16xf32>
    %c3_70 = arith.constant 3 : index
    %c0_71 = arith.constant 0 : index
    %c0_72 = arith.constant 0 : index
    %56 = vector.load %arg4[%c3_70, %c0_71, %c0_72] : memref<4x16x16xf32, #tpu.memory_space<vmem>>, vector<1x16x16xf32>
    %57 = vector.shape_cast %56 : vector<1x16x16xf32> to vector<16x16xf32>
    %cst_73 = arith.constant dense<0.000000e+00> : vector<16x16xf32>
    %58 = tpu.matmul %52, %57, %cst_73 {dimension_numbers = #tpu.dot_dimension_numbers<[1], [0], [0], [1], [0, 0, 1, 1], [], []>} : vector<16x16xf32>, vector<16x16xf32>, vector<16x16xf32> -> vector<16x16xf32>
    %c3_74 = arith.constant 3 : index
    %c0_75 = arith.constant 0 : index
    %c0_76 = arith.constant 0 : index
    %59 = vector.load %arg5[%c3_74, %c0_75, %c0_76] : memref<4x16x16xf32, #tpu.memory_space<vmem>>, vector<1x16x16xf32>
    %60 = vector.shape_cast %59 : vector<1x16x16xf32> to vector<16x16xf32>
    %cst_77 = arith.constant dense<0.000000e+00> : vector<16x16xf32>
    %61 = tpu.matmul %55, %60, %cst_77 {dimension_numbers = #tpu.dot_dimension_numbers<[1], [0], [0], [1], [0, 0, 1, 1], [], []>} : vector<16x16xf32>, vector<16x16xf32>, vector<16x16xf32> -> vector<16x16xf32>
    %62 = arith.addf %58, %61 : vector<16x16xf32>
    %c0_78 = arith.constant 0 : index
    %c3_79 = arith.constant 3 : index
    %c0_80 = arith.constant 0 : index
    %c0_81 = arith.constant 0 : index
    %c0_82 = arith.constant 0 : index
    %63 = vector.load %arg7[%c0_78, %c3_79, %c0_80, %c0_81, %c0_82] : memref<1x4x1x16x16xf32, #tpu.memory_space<vmem>>, vector<1x1x1x16x16xf32>
    %64 = vector.shape_cast %63 : vector<1x1x1x16x16xf32> to vector<16x16xf32>
    %65 = vector.shape_cast %62 : vector<16x16xf32> to vector<1x1x1x16x16xf32>
    tpu.vector_store %arg7[%c0_78, %c3_79, %c0_80, %c0_81, %c0_82], %65 {strides = array<i32>} : memref<1x4x1x16x16xf32, #tpu.memory_space<vmem>>, vector<1x1x1x16x16xf32>,
    return
  }
  func.func @transform_0(%arg0: i32, %arg1: i32) -> (i32, i32, i32) {
    %c0_i32 = arith.constant 0 : i32
    %c0_i32_0 = arith.constant 0 : i32
    %c0_i32_1 = arith.constant 0 : i32
    %c0_i32_2 = arith.constant 0 : i32
    return %c0_i32, %c0_i32_0, %c0_i32_1 : i32, i32, i32
  }
  func.func @transform_1(%arg0: i32, %arg1: i32) -> (i32, i32, i32) {
    %c0_i32 = arith.constant 0 : i32
    %c0_i32_0 = arith.constant 0 : i32
    %c0_i32_1 = arith.constant 0 : i32
    %c0_i32_2 = arith.constant 0 : i32
    return %c0_i32, %c0_i32_0, %c0_i32_1 : i32, i32, i32
  }
  func.func @transform_2(%arg0: i32, %arg1: i32) -> (i32, i32, i32) {
    %c0_i32 = arith.constant 0 : i32
    %c0_i32_0 = arith.constant 0 : i32
    %c0_i32_1 = arith.constant 0 : i32
    %c0_i32_2 = arith.constant 0 : i32
    return %c0_i32, %c0_i32_0, %c0_i32_1 : i32, i32, i32
  }
  func.func @transform_3(%arg0: i32, %arg1: i32) -> (i32, i32, i32) {
    %c0_i32 = arith.constant 0 : i32
    %c0_i32_0 = arith.constant 0 : i32
    %c0_i32_1 = arith.constant 0 : i32
    %c0_i32_2 = arith.constant 0 : i32
    return %c0_i32, %c0_i32_0, %c0_i32_1 : i32, i32, i32
  }
  func.func @transform_4(%arg0: i32, %arg1: i32) -> (i32, i32, i32, i32) {
    %c0_i32 = arith.constant 0 : i32
    %c0_i32_0 = arith.constant 0 : i32
    %c0_i32_1 = arith.constant 0 : i32
    return %arg0, %arg1, %c0_i32, %c0_i32_0 : i32, i32, i32, i32
  }
  func.func @transform_5(%arg0: i32, %arg1: i32) -> (i32, i32, i32, i32, i32) {
    %c0_i32 = arith.constant 0 : i32
    %c0_i32_0 = arith.constant 0 : i32
    %c0_i32_1 = arith.constant 0 : i32
    %c0_i32_2 = arith.constant 0 : i32
    return %arg0, %c0_i32, %arg1, %c0_i32_0, %c0_i32_1 : i32, i32, i32, i32, i32
  }
}

</mosaic_0001>

<llo_original>
// kernel: laplacian_pyramid.1
$region0: #{laplacian_pyramid.1}
  #allocation0 [shape = 'u32[]', space=smem, size = 0x4, offset = 0x4, fixed_abs, tag = 'smem constant byte address 0x4 - core index']
  #allocation1 [shape = 'u32[144,128]{1,0:T(1,128)}', space=vmem, size = 0x12000, scoped, tag = 'internal scratch']
  #allocation12 [shape = 's32[]', space=sflag, size = 0x4, offset = 0, fixed_abs, tag = 'sflag constant byte address 0x0 - dummy sync flag']
  %s0 = inlined_call_operand.hbm [shape: f32[4,16,16], index: 0, kind: input, shape index: {}]
  %s1 = inlined_call_operand.hbm [shape: f32[4,16,16], index: 1, kind: input, shape index: {}]
  %s2 = inlined_call_operand.hbm [shape: f32[4,16,16], index: 2, kind: input, shape index: {}]
  %s3 = inlined_call_operand.hbm [shape: f32[4,16,16], index: 3, kind: input, shape index: {}]
  %s4 = inlined_call_operand.hbm [shape: f32[2,3,16,16], index: 4, kind: input, shape index: {}]
  %s5 = inlined_call_operand.hbm [shape: f32[2,4,3,16,16], index: 5, kind: output, shape index: {}]
  %s6 = sld [smem:[#allocation0]]
  $region73: #{laplacian_pyramid.1} parent=0
    _
  %s8 = ssub.s32 1, %s6
  %s9 = scalar_select 0, %s8, %s6
  $region1: #{laplacian_pyramid.1} parent=0
    #allocation2 [shape = 'u8[32768]{0}', space=vmem, size = 0x8000, scoped, tag = 'input window, operand 0, single buffered']
    #allocation3 [shape = 's32[2]{0}', space=sflag, size = 0x8, scoped, tag = 'scoped memory for laplacian_pyramid.1']
    #allocation4 [shape = 's32[2]{0}', space=sflag, size = 0x8, scoped, tag = 'scoped memory for laplacian_pyramid.1']
    #allocation5 [shape = 'u8[32768]{0}', space=vmem, size = 0x8000, scoped, tag = 'input window, operand 1, single buffered']
    #allocation6 [shape = 's32[1]{0}', space=sflag, size = 0x4, scoped, tag = 'scoped memory for laplacian_pyramid.1']
    #allocation7 [shape = 'u8[32768]{0}', space=vmem, size = 0x8000, scoped, tag = 'input window, operand 2, single buffered']
    #allocation8 [shape = 'u8[32768]{0}', space=vmem, size = 0x8000, scoped, tag = 'input window, operand 3, single buffered']
    #allocation9 [shape = 's32[1]{0}', space=sflag, size = 0x4, scoped, tag = 'scoped memory for laplacian_pyramid.1']
    #allocation10 [shape = 'u8[16384]{0}', space=vmem, size = 0x4000, scoped, tag = 'input window, operand 4']
    #allocation11 [shape = 'u8[65536]{0}', space=vmem, size = 0x10000, scoped, tag = 'output window, operand 0']
    %10 = vsyncpa [#allocation3], 0
    %11 = vsyncpa [#allocation6], 0
    %12 = vsyncpa [#allocation9], 0
    %13 = vsyncpa [#allocation4], 0
    %s14 = scalar_lea.sflag [#allocation4], 1
    %15 = vsyncpa %s14, 0
    loop: start=0, step=1, limit=8
    $region2: #{laplacian_pyramid.1} parent=1 // loop_pre_header
      _
    $region3: #{laplacian_pyramid.1} parent=1 // loop_header
      %s17 = sphi 0, %s21
      %p18 = scmp.ge.s32.totalorder %s17, 8
      %s24 = sphi 0, %s36
      %s25 = sphi 0, %s32
      %s26 = sphi 0, %s24
      %s27 = sphi 0, %s25
      %s28 = sphi 0, %s26
      %s29 = sphi 0, %s27
      %s37 = sphi 0, %s37
      %s39 = sphi 0, %s37
      %s40 = sphi 0, %s39
      %s54 = sphi 0, %s40
      %s58 = sphi 0, %s58
      %s60 = sphi 0, %s58
      %s61 = sphi 0, %s60
      %s75 = sphi 0, %s61
      %s79 = sphi 0, %s79
      %s81 = sphi 0, %s79
      %s82 = sphi 0, %s81
      %s96 = sphi 0, %s82
      %s100 = sphi 0, %s100
      %s102 = sphi 0, %s100
      %s103 = sphi 0, %s102
      %s117 = sphi 0, %s103
      %s125 = sphi 0, %s127
      %s128 = sphi 0, %s125
      %s129 = sphi 0, %s128
      %s145 = sphi 0, %s129
      %s153 = sphi 0, %s155
      %s156 = sphi 0, %s153
      %s157 = sphi 0, %s156
      %s173 = sphi 0, %s157
    $region4: #{laplacian_pyramid.1} parent=1 // loop_header_branch
      %20 = sbr.rel (%p18) target = $region8
    $region5: #{laplacian_pyramid.1} parent=1 // loop_body
      %s22 = ssub.s32 %s17, 1
      %s23 = ssub.s32 %s17, 2
      %s30 = sadd.s32 1, %s25
      %p31 = scmp.ge.s32.totalorder %s30, 3
      %s32 = scalar_select %p31, 0, %s30
      %s33 = sadd.s32 1, %s24
      %s34 = scalar_select %p31, %s33, %s24
      %p35 = scmp.ge.s32.totalorder %s34, 2
      %s36 = scalar_select %p35, 0, %s34
      %s38 = sadd.s32 %s37, 1
      %p41 = scmp.eq.s32.totalorder %s17, 5
      %p42 = scmp.ne.s32.totalorder %s37, %s39
      %p43 = scmp.eq.s32.totalorder %s17, 0
      %p44 = por %p42, %p43
      %p45 = scmp.ne.s32.totalorder %s37, %s39
      %p46 = scmp.eq.s32.totalorder %s22, 5
      %p47 = por %p45, %p46
      %p48 = scmp.ne.s32.totalorder %s39, %s40
      %p49 = scmp.eq.s32.totalorder %s22, 0
      %p50 = por %p48, %p49
      %p51 = scmp.ne.s32.totalorder %s39, %s40
      %p52 = scmp.eq.s32.totalorder %s23, 5
      %p53 = por %p51, %p52
      %p55 = scmp.ne.s32.totalorder %s40, %s54
      %p56 = scmp.eq.s32.totalorder %s23, 0
      %p57 = por %p55, %p56
      %s59 = sadd.s32 %s58, 1
      %p62 = scmp.eq.s32.totalorder %s17, 5
      %p63 = scmp.ne.s32.totalorder %s58, %s60
      %p64 = scmp.eq.s32.totalorder %s17, 0
      %p65 = por %p63, %p64
      %p66 = scmp.ne.s32.totalorder %s58, %s60
      %p67 = scmp.eq.s32.totalorder %s22, 5
      %p68 = por %p66, %p67
      %p69 = scmp.ne.s32.totalorder %s60, %s61
      %p70 = scmp.eq.s32.totalorder %s22, 0
      %p71 = por %p69, %p70
      %p72 = scmp.ne.s32.totalorder %s60, %s61
      %p73 = scmp.eq.s32.totalorder %s23, 5
      %p74 = por %p72, %p73
      %p76 = scmp.ne.s32.totalorder %s61, %s75
      %p77 = scmp.eq.s32.totalorder %s23, 0
      %p78 = por %p76, %p77
      %s80 = sadd.s32 %s79, 1
      %p83 = scmp.eq.s32.totalorder %s17, 5
      %p84 = scmp.ne.s32.totalorder %s79, %s81
      %p85 = scmp.eq.s32.totalorder %s17, 0
      %p86 = por %p84, %p85
      %p87 = scmp.ne.s32.totalorder %s79, %s81
      %p88 = scmp.eq.s32.totalorder %s22, 5
      %p89 = por %p87, %p88
      %p90 = scmp.ne.s32.totalorder %s81, %s82
      %p91 = scmp.eq.s32.totalorder %s22, 0
      %p92 = por %p90, %p91
      %p93 = scmp.ne.s32.totalorder %s81, %s82
      %p94 = scmp.eq.s32.totalorder %s23, 5
      %p95 = por %p93, %p94
      %p97 = scmp.ne.s32.totalorder %s82, %s96
      %p98 = scmp.eq.s32.totalorder %s23, 0
      %p99 = por %p97, %p98
      %s101 = sadd.s32 %s100, 1
      %p104 = scmp.eq.s32.totalorder %s17, 5
      %p105 = scmp.ne.s32.totalorder %s100, %s102
      %p106 = scmp.eq.s32.totalorder %s17, 0
      %p107 = por %p105, %p106
      %p108 = scmp.ne.s32.totalorder %s100, %s102
      %p109 = scmp.eq.s32.totalorder %s22, 5
      %p110 = por %p108, %p109
      %p111 = scmp.ne.s32.totalorder %s102, %s103
      %p112 = scmp.eq.s32.totalorder %s22, 0
      %p113 = por %p111, %p112
      %p114 = scmp.ne.s32.totalorder %s102, %s103
      %p115 = scmp.eq.s32.totalorder %s23, 5
      %p116 = por %p114, %p115
      %p118 = scmp.ne.s32.totalorder %s103, %s117
      %p119 = scmp.eq.s32.totalorder %s23, 0
      %p120 = por %p118, %p119
      %s121 = ssub.s32 %s24, %s36
      %s122 = ssub.s32 %s25, %s32
      %s123 = sor.u32 %s121, %s122
      %p124 = scmp.eq.s32.totalorder %s123, 0
      %s126 = sadd.s32 %s125, 1
      %s127 = scalar_select %p124, %s125, %s126
      %p130 = pneg %p124
      %p131 = scmp.eq.s32.totalorder %s17, 5
      %p132 = por %p130, %p131
      %p133 = scmp.ne.s32.totalorder %s125, %s128
      %p134 = scmp.eq.s32.totalorder %s17, 0
      %p135 = por %p133, %p134
      %p136 = scmp.ne.s32.totalorder %s125, %s128
      %p137 = scmp.eq.s32.totalorder %s22, 5
      %p138 = por %p136, %p137
      %p139 = scmp.ne.s32.totalorder %s128, %s129
      %p140 = scmp.eq.s32.totalorder %s22, 0
      %p141 = por %p139, %p140
      %p142 = scmp.ne.s32.totalorder %s128, %s129
      %p143 = scmp.eq.s32.totalorder %s23, 5
      %p144 = por %p142, %p143
      %p146 = scmp.ne.s32.totalorder %s129, %s145
      %p147 = scmp.eq.s32.totalorder %s23, 0
      %p148 = por %p146, %p147
      %s149 = ssub.s32 %s24, %s36
      %s150 = ssub.s32 %s25, %s32
      %s151 = sor.u32 %s149, %s150
      %p152 = scmp.eq.s32.totalorder %s151, 0
      %s154 = sadd.s32 %s153, 1
      %s155 = scalar_select %p152, %s153, %s154
      %p158 = pneg %p152
      %p159 = scmp.eq.s32.totalorder %s17, 5
      %p160 = por %p158, %p159
      %p161 = scmp.ne.s32.totalorder %s153, %s156
      %p162 = scmp.eq.s32.totalorder %s17, 0
      %p163 = por %p161, %p162
      %p164 = scmp.ne.s32.totalorder %s153, %s156
      %p165 = scmp.eq.s32.totalorder %s22, 5
      %p166 = por %p164, %p165
      %p167 = scmp.ne.s32.totalorder %s156, %s157
      %p168 = scmp.eq.s32.totalorder %s22, 0
      %p169 = por %p167, %p168
      %p170 = scmp.ne.s32.totalorder %s156, %s157
      %p171 = scmp.eq.s32.totalorder %s23, 5
      %p172 = por %p170, %p171
      %p174 = scmp.ne.s32.totalorder %s157, %s173
      %p175 = scmp.eq.s32.totalorder %s23, 0
      %p176 = por %p174, %p175
      %p177 = scmp.le.s32.totalorder 1, %s17
      %p178 = scmp.lt.s32.totalorder %s17, 7
      %p179 = pnand %p177, %p178
      %p180 = pneg %p179
      // Predicated region
      $region9: #{laplacian_pyramid.1} parent=5 // pred_check
        _
      $region10: #{laplacian_pyramid.1} parent=5 // pred_check_branch
        %182 = sbr.rel (%p179) target = $region12
      $region11: #{laplacian_pyramid.1} parent=5 // pred_region
        %s183 = ssub.s32 %s17, 1
        // Predicated region
        $region13: #{laplacian_pyramid.1} parent=11 // pred_check
          %p184 = pneg %p50
        $region14: #{laplacian_pyramid.1} parent=11 // pred_check_branch
          %186 = sbr.rel (%p184) target = $region16
        $region15: #{laplacian_pyramid.1} parent=11 // pred_region
          %s188 = ssub.s32 1024, 1024
          %189 = vsyncadd [#allocation3], %s188
          %s190 = sshll.u32 [#allocation2], 4
          %s191 = int_to_ptr.vmem [resolvable:$true] %s190
          %196 = dma.hbm_to_vmem [thread:$0]  %s0, 1024, %s191, [#allocation3], 128, 128, 8
        $region16: #{laplacian_pyramid.1} parent=11 // pred_fallthru
          _
        // Predicated region
        $region17: #{laplacian_pyramid.1} parent=11 // pred_check
          %p197 = pneg %p71
        $region18: #{laplacian_pyramid.1} parent=11 // pred_check_branch
          %199 = sbr.rel (%p197) target = $region20
        $region19: #{laplacian_pyramid.1} parent=11 // pred_region
          %s201 = ssub.s32 1024, 1024
          %202 = vsyncadd [#allocation6], %s201
          %s203 = sshll.u32 [#allocation5], 4
          %s204 = int_to_ptr.vmem [resolvable:$true] %s203
          %209 = dma.hbm_to_vmem [thread:$0]  %s1, 1024, %s204, [#allocation6], 128, 128, 8
        $region20: #{laplacian_pyramid.1} parent=11 // pred_fallthru
          _
        // Predicated region
        $region21: #{laplacian_pyramid.1} parent=11 // pred_check
          %p210 = pneg %p92
        $region22: #{laplacian_pyramid.1} parent=11 // pred_check_branch
          %212 = sbr.rel (%p210) target = $region24
        $region23: #{laplacian_pyramid.1} parent=11 // pred_region
          %s214 = ssub.s32 1024, 1024
          %215 = vsyncadd [#allocation6], %s214
          %s216 = sshll.u32 [#allocation7], 4
          %s217 = int_to_ptr.vmem [resolvable:$true] %s216
          %222 = dma.hbm_to_vmem [thread:$0]  %s2, 1024, %s217, [#allocation6], 128, 128, 8
        $region24: #{laplacian_pyramid.1} parent=11 // pred_fallthru
          _
        // Predicated region
        $region25: #{laplacian_pyramid.1} parent=11 // pred_check
          %p223 = pneg %p113
        $region26: #{laplacian_pyramid.1} parent=11 // pred_check_branch
          %225 = sbr.rel (%p223) target = $region28
        $region27: #{laplacian_pyramid.1} parent=11 // pred_region
          %s227 = ssub.s32 1024, 1024
          %228 = vsyncadd [#allocation9], %s227
          %s229 = sshll.u32 [#allocation8], 4
          %s230 = int_to_ptr.vmem [resolvable:$true] %s229
          %235 = dma.hbm_to_vmem [thread:$0]  %s3, 1024, %s230, [#allocation9], 128, 128, 8
        $region28: #{laplacian_pyramid.1} parent=11 // pred_fallthru
          _
      $region12: #{laplacian_pyramid.1} parent=5 // pred_fallthru
        _
      %p236 = scmp.lt.s32.totalorder %s17, 6
      // Predicated region
      $region29: #{laplacian_pyramid.1} parent=5 // pred_check
        %p237 = pneg %p236
      $region30: #{laplacian_pyramid.1} parent=5 // pred_check_branch
        %239 = sbr.rel (%p237) target = $region32
      $region31: #{laplacian_pyramid.1} parent=5 // pred_region
        // Predicated region
        $region33: #{laplacian_pyramid.1} parent=31 // pred_check
          %p240 = pneg %p135
        $region34: #{laplacian_pyramid.1} parent=31 // pred_check_branch
          %242 = sbr.rel (%p240) target = $region36
        $region35: #{laplacian_pyramid.1} parent=31 // pred_region
          %s243 = sand.u32 %s17, 1
          %s244 = scalar_lea.sflag [#allocation3], %s243
          %s245 = sand.u32 %s125, 1
          %s246 = smul.addr %s245, 16
          %s247 = scalar_lea.vmem [#allocation10], %s246
          %s249 = ssub.s32 256, 256
          %250 = vsyncadd %s244, %s249
          %s251 = smul.addr %s25, 2
          %s252 = smul.addr %s24, 6
          %s253 = sadd.s32 %s251, %s252
          %s254 = smul.addr %s253, 128
          %s255 = scalar_lea.hbm %s4, %s254
          %s256 = sshll.u32 %s247, 4
          %s257 = int_to_ptr.vmem [resolvable:$true] %s256
          %262 = dma.hbm_to_vmem [thread:$0]  %s255, 256, %s257, %s244, 128, 128, 8
        $region36: #{laplacian_pyramid.1} parent=31 // pred_fallthru
          _
      $region32: #{laplacian_pyramid.1} parent=5 // pred_fallthru
        _
      %p263 = scmp.le.s32.totalorder 1, %s17
      %p264 = scmp.lt.s32.totalorder %s17, 7
      %p265 = pnand %p263, %p264
      %p266 = pneg %p265
      // Predicated region
      $region37: #{laplacian_pyramid.1} parent=5 // pred_check
        _
      $region38: #{laplacian_pyramid.1} parent=5 // pred_check_branch
        %268 = sbr.rel (%p265) target = $region40
      $region39: #{laplacian_pyramid.1} parent=5 // pred_region
        %s269 = ssub.s32 %s17, 1
        // Predicated region
        $region41: #{laplacian_pyramid.1} parent=39 // pred_check
          %p270 = pneg %p50
        $region42: #{laplacian_pyramid.1} parent=39 // pred_check_branch
          %272 = sbr.rel (%p270) target = $region44
        $region43: #{laplacian_pyramid.1} parent=39 // pred_region
          %273 = dma.done [#allocation3], 1024
        $region44: #{laplacian_pyramid.1} parent=39 // pred_fallthru
          _
        // Predicated region
        $region45: #{laplacian_pyramid.1} parent=39 // pred_check
          %p274 = pneg %p71
        $region46: #{laplacian_pyramid.1} parent=39 // pred_check_branch
          %276 = sbr.rel (%p274) target = $region48
        $region47: #{laplacian_pyramid.1} parent=39 // pred_region
          %277 = dma.done [#allocation6], 1024
        $region48: #{laplacian_pyramid.1} parent=39 // pred_fallthru
          _
        // Predicated region
        $region49: #{laplacian_pyramid.1} parent=39 // pred_check
          %p278 = pneg %p92
        $region50: #{laplacian_pyramid.1} parent=39 // pred_check_branch
          %280 = sbr.rel (%p278) target = $region52
        $region51: #{laplacian_pyramid.1} parent=39 // pred_region
          %281 = dma.done [#allocation6], 1024
        $region52: #{laplacian_pyramid.1} parent=39 // pred_fallthru
          _
        // Predicated region
        $region53: #{laplacian_pyramid.1} parent=39 // pred_check
          %p282 = pneg %p113
        $region54: #{laplacian_pyramid.1} parent=39 // pred_check_branch
          %284 = sbr.rel (%p282) target = $region56
        $region55: #{laplacian_pyramid.1} parent=39 // pred_region
          %285 = dma.done [#allocation9], 1024
        $region56: #{laplacian_pyramid.1} parent=39 // pred_fallthru
          _
        %s286 = sand.u32 %s22, 1
        %s287 = scalar_lea.sflag [#allocation3], %s286
        %s288 = sand.u32 %s128, 1
        %s289 = smul.addr %s288, 16
        %s290 = scalar_lea.vmem [#allocation10], %s289
        // Predicated region
        $region57: #{laplacian_pyramid.1} parent=39 // pred_check
          %p291 = pneg %p141
        $region58: #{laplacian_pyramid.1} parent=39 // pred_check_branch
          %293 = sbr.rel (%p291) target = $region60
        $region59: #{laplacian_pyramid.1} parent=39 // pred_region
          %294 = dma.done %s287, 256
        $region60: #{laplacian_pyramid.1} parent=39 // pred_fallthru
          _
        %p295 = pneg %p50
        %p296 = pneg %p47
        %p297 = pneg %p71
        %p298 = pneg %p68
        %p299 = pneg %p92
        %p300 = pneg %p89
        %p301 = pneg %p113
        %p302 = pneg %p110
        %s303 = sand.u32 %s22, 1
        %s304 = scalar_lea.sflag [#allocation3], %s303
        %s305 = sand.u32 %s128, 1
        %s306 = smul.addr %s305, 16
        %s307 = scalar_lea.vmem [#allocation10], %s306
        %p308 = pneg %p141
        %p309 = pneg %p138
        %p310 = pneg %p169
        %p311 = pneg %p166
        %s312 = sand.u32 %s156, 1
        %s313 = scalar_lea.sflag [#allocation4], %s312
        %s314 = sand.u32 %s156, 1
        %s315 = smul.addr %s314, 64
        %s316 = scalar_lea.vmem [#allocation11], %s315
        %v317 = vld [vmem:[%s290] sm:$0xff]
        %v318 = vld [vmem:[%s290 + $0x8] sm:$0xff]
        %v319 = vld [vmem:[#allocation2] sm:$0xff]
        %v320 = vld [vmem:[#allocation2 + $0x8] sm:$0xff]
        %vm321 = vcmask 130048
        %v323 = vsel %vm321, %v319, 0
        %v326 = vsel %vm321, %v320, 0
        %328 = vmatprep.subr.mxu0 0.0
        %329 = vmatpush1.msra.mxu0 0.0
        %330 = vmatprep.subr.mxu0 0.0
        %331 = vmatpush1.msra.mxu0 0.0
        %332 = vmatprep.subr.mxu0 0.0
        %333 = vmatpush1.msra.mxu0 0.0
        %334 = vmatprep.subr.mxu0 0.0
        %335 = vmatpush1.msra.mxu0 0.0
        %336 = vmatprep.subr.mxu0 0.0
        %337 = vmatpush1.msra.mxu0 0.0
        %338 = vmatprep.subr.mxu0 0.0
        %339 = vmatpush1.msra.mxu0 0.0
        %340 = vmatprep.subr.mxu0 0.0
        %341 = vmatpush1.msra.mxu0 0.0
        %342 = vmatprep.subr.mxu0 0.0
        %343 = vmatpush1.msra.mxu0 0.0
        %344 = vmatprep.subr.mxu0 0.0
        %345 = vmatpush1.msra.mxu0 0.0
        %346 = vmatprep.subr.mxu0 0.0
        %347 = vmatpush1.msra.mxu0 0.0
        %348 = vmatprep.subr.mxu0 0.0
        %349 = vmatpush1.msra.mxu0 0.0
        %350 = vmatprep.subr.mxu0 0.0
        %351 = vmatpush1.msra.mxu0 0.0
        %352 = vmatprep.subr.mxu0 0.0
        %353 = vmatpush1.msra.mxu0 0.0
        %354 = vmatprep.subr.mxu0 0.0
        %355 = vmatpush1.msra.mxu0 0.0
        %356 = vmatprep.subr.mxu0 0.0
        %357 = vmatpush1.msra.mxu0 %v318
        %358 = vmatprep.subr.mxu0 0.0
        %359 = vmatpush1.msra.mxu0 %v317
        %360 = vmatprep.subr.mxu0 0.0
        %361 = vmatpush2.msra.mxu0 0.0
        %362 = vmatprep.subr.mxu0 0.0
        %363 = vmatpush2.msra.mxu0 0.0
        %364 = vmatprep.subr.mxu0 0.0
        %365 = vmatpush2.msra.mxu0 0.0
        %366 = vmatprep.subr.mxu0 0.0
        %367 = vmatpush2.msra.mxu0 0.0
        %368 = vmatprep.subr.mxu0 0.0
        %369 = vmatpush2.msra.mxu0 0.0
        %370 = vmatprep.subr.mxu0 0.0
        %371 = vmatpush2.msra.mxu0 0.0
        %372 = vmatprep.subr.mxu0 0.0
        %373 = vmatpush2.msra.mxu0 0.0
        %374 = vmatprep.subr.mxu0 0.0
        %375 = vmatpush2.msra.mxu0 0.0
        %376 = vmatprep.subr.mxu0 0.0
        %377 = vmatpush2.msra.mxu0 0.0
        %378 = vmatprep.subr.mxu0 0.0
        %379 = vmatpush2.msra.mxu0 0.0
        %380 = vmatprep.subr.mxu0 0.0
        %381 = vmatpush2.msra.mxu0 0.0
        %382 = vmatprep.subr.mxu0 0.0
        %383 = vmatpush2.msra.mxu0 0.0
        %384 = vmatprep.subr.mxu0 0.0
        %385 = vmatpush2.msra.mxu0 0.0
        %386 = vmatprep.subr.mxu0 0.0
        %387 = vmatpush2.msra.mxu0 0.0
        %388 = vmatprep.subr.mxu0 0.0
        %389 = vmatpush2.msra.mxu0 0.0
        %390 = vmatprep.subr.mxu0 0.0
        %391 = vmatpush2.msra.mxu0 0.0
        %392 = vmatprep.mubr.f32.mxu0 0.0
        %393 = vmatmul.mubr.f32.gmra.mxu0 %v323
        %v394 = vpop.f32.mrf.mxu0
        %v395 = vadd.f32 0.0, %v394
        %v396 = vpop.f32.mrf.mxu0
        %397 = vmatprep.mubr.f32.mxu0 0.0
        %398 = vmatmul.mubr.f32.gmra.mxu0 %v326
        %v399 = vpop.f32.mrf.mxu0
        %v400 = vadd.f32 0.0, %v399
        %v401 = vpop.f32.mrf.mxu0
        %402 = vdwg.mxu0
        %v403 = vld [vmem:[#allocation5] sm:$0xff]
        %v404 = vld [vmem:[#allocation5 + $0x8] sm:$0xff]
        %v406 = vsel %vm321, %v403, 0
        %v409 = vsel %vm321, %v404, 0
        %411 = vmatprep.subr.mxu0 0.0
        %412 = vmatpush1.msra.mxu0 0.0
        %413 = vmatprep.subr.mxu0 0.0
        %414 = vmatpush1.msra.mxu0 0.0
        %415 = vmatprep.subr.mxu0 0.0
        %416 = vmatpush1.msra.mxu0 0.0
        %417 = vmatprep.subr.mxu0 0.0
        %418 = vmatpush1.msra.mxu0 0.0
        %419 = vmatprep.subr.mxu0 0.0
        %420 = vmatpush1.msra.mxu0 0.0
        %421 = vmatprep.subr.mxu0 0.0
        %422 = vmatpush1.msra.mxu0 0.0
        %423 = vmatprep.subr.mxu0 0.0
        %424 = vmatpush1.msra.mxu0 0.0
        %425 = vmatprep.subr.mxu0 0.0
        %426 = vmatpush1.msra.mxu0 0.0
        %427 = vmatprep.subr.mxu0 0.0
        %428 = vmatpush1.msra.mxu0 0.0
        %429 = vmatprep.subr.mxu0 0.0
        %430 = vmatpush1.msra.mxu0 0.0
        %431 = vmatprep.subr.mxu0 0.0
        %432 = vmatpush1.msra.mxu0 0.0
        %433 = vmatprep.subr.mxu0 0.0
        %434 = vmatpush1.msra.mxu0 0.0
        %435 = vmatprep.subr.mxu0 0.0
        %436 = vmatpush1.msra.mxu0 0.0
        %437 = vmatprep.subr.mxu0 0.0
        %438 = vmatpush1.msra.mxu0 0.0
        %439 = vmatprep.subr.mxu0 0.0
        %440 = vmatpush1.msra.mxu0 %v318
        %441 = vmatprep.subr.mxu0 0.0
        %442 = vmatpush1.msra.mxu0 %v317
        %443 = vmatprep.subr.mxu0 0.0
        %444 = vmatpush2.msra.mxu0 0.0
        %445 = vmatprep.subr.mxu0 0.0
        %446 = vmatpush2.msra.mxu0 0.0
        %447 = vmatprep.subr.mxu0 0.0
        %448 = vmatpush2.msra.mxu0 0.0
        %449 = vmatprep.subr.mxu0 0.0
        %450 = vmatpush2.msra.mxu0 0.0
        %451 = vmatprep.subr.mxu0 0.0
        %452 = vmatpush2.msra.mxu0 0.0
        %453 = vmatprep.subr.mxu0 0.0
        %454 = vmatpush2.msra.mxu0 0.0
        %455 = vmatprep.subr.mxu0 0.0
        %456 = vmatpush2.msra.mxu0 0.0
        %457 = vmatprep.subr.mxu0 0.0
        %458 = vmatpush2.msra.mxu0 0.0
        %459 = vmatprep.subr.mxu0 0.0
        %460 = vmatpush2.msra.mxu0 0.0
        %461 = vmatprep.subr.mxu0 0.0
        %462 = vmatpush2.msra.mxu0 0.0
        %463 = vmatprep.subr.mxu0 0.0
        %464 = vmatpush2.msra.mxu0 0.0
        %465 = vmatprep.subr.mxu0 0.0
        %466 = vmatpush2.msra.mxu0 0.0
        %467 = vmatprep.subr.mxu0 0.0
        %468 = vmatpush2.msra.mxu0 0.0
        %469 = vmatprep.subr.mxu0 0.0
        %470 = vmatpush2.msra.mxu0 0.0
        %471 = vmatprep.subr.mxu0 0.0
        %472 = vmatpush2.msra.mxu0 0.0
        %473 = vmatprep.subr.mxu0 0.0
        %474 = vmatpush2.msra.mxu0 0.0
        %475 = vmatprep.mubr.f32.mxu0 0.0
        %476 = vmatmul.mubr.f32.gmra.mxu0 %v406
        %v477 = vpop.f32.mrf.mxu0
        %v478 = vadd.f32 0.0, %v477
        %v479 = vpop.f32.mrf.mxu0
        %480 = vmatprep.mubr.f32.mxu0 0.0
        %481 = vmatmul.mubr.f32.gmra.mxu0 %v409
        %v482 = vpop.f32.mrf.mxu0
        %v483 = vadd.f32 0.0, %v482
        %v484 = vpop.f32.mrf.mxu0
        %485 = vdwg.mxu0
        %v486 = vld [vmem:[#allocation7] sm:$0xff]
        %v487 = vld [vmem:[#allocation7 + $0x8] sm:$0xff]
        %v488 = vld [vmem:[#allocation8] sm:$0xff]
        %v489 = vld [vmem:[#allocation8 + $0x8] sm:$0xff]
        %v491 = vsel %vm321, %v478, 0
        %v494 = vsel %vm321, %v483, 0
        %496 = vmatprep.subr.mxu0 0.0
        %497 = vmatpush1.msra.mxu0 0.0
        %498 = vmatprep.subr.mxu0 0.0
        %499 = vmatpush1.msra.mxu0 0.0
        %500 = vmatprep.subr.mxu0 0.0
        %501 = vmatpush1.msra.mxu0 0.0
        %502 = vmatprep.subr.mxu0 0.0
        %503 = vmatpush1.msra.mxu0 0.0
        %504 = vmatprep.subr.mxu0 0.0
        %505 = vmatpush1.msra.mxu0 0.0
        %506 = vmatprep.subr.mxu0 0.0
        %507 = vmatpush1.msra.mxu0 0.0
        %508 = vmatprep.subr.mxu0 0.0
        %509 = vmatpush1.msra.mxu0 0.0
        %510 = vmatprep.subr.mxu0 0.0
        %511 = vmatpush1.msra.mxu0 0.0
        %512 = vmatprep.subr.mxu0 0.0
        %513 = vmatpush1.msra.mxu0 0.0
        %514 = vmatprep.subr.mxu0 0.0
        %515 = vmatpush1.msra.mxu0 0.0
        %516 = vmatprep.subr.mxu0 0.0
        %517 = vmatpush1.msra.mxu0 0.0
        %518 = vmatprep.subr.mxu0 0.0
        %519 = vmatpush1.msra.mxu0 0.0
        %520 = vmatprep.subr.mxu0 0.0
        %521 = vmatpush1.msra.mxu0 0.0
        %522 = vmatprep.subr.mxu0 0.0
        %523 = vmatpush1.msra.mxu0 0.0
        %524 = vmatprep.subr.mxu0 0.0
        %525 = vmatpush1.msra.mxu0 %v489
        %526 = vmatprep.subr.mxu0 0.0
        %527 = vmatpush1.msra.mxu0 %v488
        %528 = vmatprep.subr.mxu0 0.0
        %529 = vmatpush2.msra.mxu0 0.0
        %530 = vmatprep.subr.mxu0 0.0
        %531 = vmatpush2.msra.mxu0 0.0
        %532 = vmatprep.subr.mxu0 0.0
        %533 = vmatpush2.msra.mxu0 0.0
        %534 = vmatprep.subr.mxu0 0.0
        %535 = vmatpush2.msra.mxu0 0.0
        %536 = vmatprep.subr.mxu0 0.0
        %537 = vmatpush2.msra.mxu0 0.0
        %538 = vmatprep.subr.mxu0 0.0
        %539 = vmatpush2.msra.mxu0 0.0
        %540 = vmatprep.subr.mxu0 0.0
        %541 = vmatpush2.msra.mxu0 0.0
        %542 = vmatprep.subr.mxu0 0.0
        %543 = vmatpush2.msra.mxu0 0.0
        %544 = vmatprep.subr.mxu0 0.0
        %545 = vmatpush2.msra.mxu0 0.0
        %546 = vmatprep.subr.mxu0 0.0
        %547 = vmatpush2.msra.mxu0 0.0
        %548 = vmatprep.subr.mxu0 0.0
        %549 = vmatpush2.msra.mxu0 0.0
        %550 = vmatprep.subr.mxu0 0.0
        %551 = vmatpush2.msra.mxu0 0.0
        %552 = vmatprep.subr.mxu0 0.0
        %553 = vmatpush2.msra.mxu0 0.0
        %554 = vmatprep.subr.mxu0 0.0
        %555 = vmatpush2.msra.mxu0 0.0
        %556 = vmatprep.subr.mxu0 0.0
        %557 = vmatpush2.msra.mxu0 0.0
        %558 = vmatprep.subr.mxu0 0.0
        %559 = vmatpush2.msra.mxu0 0.0
        %560 = vmatprep.mubr.f32.mxu0 0.0
        %561 = vmatmul.mubr.f32.gmra.mxu0 %v491
        %v562 = vpop.f32.mrf.mxu0
        %v563 = vadd.f32 0.0, %v562
        %v564 = vpop.f32.mrf.mxu0
        %565 = vmatprep.mubr.f32.mxu0 0.0
        %566 = vmatmul.mubr.f32.gmra.mxu0 %v494
        %v567 = vpop.f32.mrf.mxu0
        %v568 = vadd.f32 0.0, %v567
        %v569 = vpop.f32.mrf.mxu0
        %570 = vdwg.mxu0
        %v572 = vsel %vm321, %v395, 0
        %v575 = vsel %vm321, %v400, 0
        %577 = vmatprep.subr.mxu0 0.0
        %578 = vmatpush1.msra.mxu0 0.0
        %579 = vmatprep.subr.mxu0 0.0
        %580 = vmatpush1.msra.mxu0 0.0
        %581 = vmatprep.subr.mxu0 0.0
        %582 = vmatpush1.msra.mxu0 0.0
        %583 = vmatprep.subr.mxu0 0.0
        %584 = vmatpush1.msra.mxu0 0.0
        %585 = vmatprep.subr.mxu0 0.0
        %586 = vmatpush1.msra.mxu0 0.0
        %587 = vmatprep.subr.mxu0 0.0
        %588 = vmatpush1.msra.mxu0 0.0
        %589 = vmatprep.subr.mxu0 0.0
        %590 = vmatpush1.msra.mxu0 0.0
        %591 = vmatprep.subr.mxu0 0.0
        %592 = vmatpush1.msra.mxu0 0.0
        %593 = vmatprep.subr.mxu0 0.0
        %594 = vmatpush1.msra.mxu0 0.0
        %595 = vmatprep.subr.mxu0 0.0
        %596 = vmatpush1.msra.mxu0 0.0
        %597 = vmatprep.subr.mxu0 0.0
        %598 = vmatpush1.msra.mxu0 0.0
        %599 = vmatprep.subr.mxu0 0.0
        %600 = vmatpush1.msra.mxu0 0.0
        %601 = vmatprep.subr.mxu0 0.0
        %602 = vmatpush1.msra.mxu0 0.0
        %603 = vmatprep.subr.mxu0 0.0
        %604 = vmatpush1.msra.mxu0 0.0
        %605 = vmatprep.subr.mxu0 0.0
        %606 = vmatpush1.msra.mxu0 %v487
        %607 = vmatprep.subr.mxu0 0.0
        %608 = vmatpush1.msra.mxu0 %v486
        %609 = vmatprep.subr.mxu0 0.0
        %610 = vmatpush2.msra.mxu0 0.0
        %611 = vmatprep.subr.mxu0 0.0
        %612 = vmatpush2.msra.mxu0 0.0
        %613 = vmatprep.subr.mxu0 0.0
        %614 = vmatpush2.msra.mxu0 0.0
        %615 = vmatprep.subr.mxu0 0.0
        %616 = vmatpush2.msra.mxu0 0.0
        %617 = vmatprep.subr.mxu0 0.0
        %618 = vmatpush2.msra.mxu0 0.0
        %619 = vmatprep.subr.mxu0 0.0
        %620 = vmatpush2.msra.mxu0 0.0
        %621 = vmatprep.subr.mxu0 0.0
        %622 = vmatpush2.msra.mxu0 0.0
        %623 = vmatprep.subr.mxu0 0.0
        %624 = vmatpush2.msra.mxu0 0.0
        %625 = vmatprep.subr.mxu0 0.0
        %626 = vmatpush2.msra.mxu0 0.0
        %627 = vmatprep.subr.mxu0 0.0
        %628 = vmatpush2.msra.mxu0 0.0
        %629 = vmatprep.subr.mxu0 0.0
        %630 = vmatpush2.msra.mxu0 0.0
        %631 = vmatprep.subr.mxu0 0.0
        %632 = vmatpush2.msra.mxu0 0.0
        %633 = vmatprep.subr.mxu0 0.0
        %634 = vmatpush2.msra.mxu0 0.0
        %635 = vmatprep.subr.mxu0 0.0
        %636 = vmatpush2.msra.mxu0 0.0
        %637 = vmatprep.subr.mxu0 0.0
        %638 = vmatpush2.msra.mxu0 0.0
        %639 = vmatprep.subr.mxu0 0.0
        %640 = vmatpush2.msra.mxu0 0.0
        %641 = vmatprep.mubr.f32.mxu0 0.0
        %642 = vmatmul.mubr.f32.gmra.mxu0 %v572
        %v643 = vpop.f32.mrf.mxu0
        %v644 = vadd.f32 %v563, %v643
        %v645 = vpop.f32.mrf.mxu0
        %646 = vmatprep.mubr.f32.mxu0 0.0
        %647 = vmatmul.mubr.f32.gmra.mxu0 %v575
        %v648 = vpop.f32.mrf.mxu0
        %v649 = vadd.f32 %v568, %v648
        %v650 = vpop.f32.mrf.mxu0
        %651 = vdwg.mxu0
        %652 = vst.msk [vmem:[%s316] sm:$0xff] %vm321, %v644
        %653 = vst.msk [vmem:[%s316 + $0x8] sm:$0xff] %vm321, %v649
        %s654 = scalar_lea.vmem [#allocation2], 16
        %v655 = vld [vmem:[%s654] sm:$0xff]
        %v656 = vld [vmem:[%s654 + $0x8] sm:$0xff]
        %v658 = vsel %vm321, %v655, 0
        %v661 = vsel %vm321, %v656, 0
        %663 = vmatprep.subr.mxu0 0.0
        %664 = vmatpush1.msra.mxu0 0.0
        %665 = vmatprep.subr.mxu0 0.0
        %666 = vmatpush1.msra.mxu0 0.0
        %667 = vmatprep.subr.mxu0 0.0
        %668 = vmatpush1.msra.mxu0 0.0
        %669 = vmatprep.subr.mxu0 0.0
        %670 = vmatpush1.msra.mxu0 0.0
        %671 = vmatprep.subr.mxu0 0.0
        %672 = vmatpush1.msra.mxu0 0.0
        %673 = vmatprep.subr.mxu0 0.0
        %674 = vmatpush1.msra.mxu0 0.0
        %675 = vmatprep.subr.mxu0 0.0
        %676 = vmatpush1.msra.mxu0 0.0
        %677 = vmatprep.subr.mxu0 0.0
        %678 = vmatpush1.msra.mxu0 0.0
        %679 = vmatprep.subr.mxu0 0.0
        %680 = vmatpush1.msra.mxu0 0.0
        %681 = vmatprep.subr.mxu0 0.0
        %682 = vmatpush1.msra.mxu0 0.0
        %683 = vmatprep.subr.mxu0 0.0
        %684 = vmatpush1.msra.mxu0 0.0
        %685 = vmatprep.subr.mxu0 0.0
        %686 = vmatpush1.msra.mxu0 0.0
        %687 = vmatprep.subr.mxu0 0.0
        %688 = vmatpush1.msra.mxu0 0.0
        %689 = vmatprep.subr.mxu0 0.0
        %690 = vmatpush1.msra.mxu0 0.0
        %691 = vmatprep.subr.mxu0 0.0
        %692 = vmatpush1.msra.mxu0 %v318
        %693 = vmatprep.subr.mxu0 0.0
        %694 = vmatpush1.msra.mxu0 %v317
        %695 = vmatprep.subr.mxu0 0.0
        %696 = vmatpush2.msra.mxu0 0.0
        %697 = vmatprep.subr.mxu0 0.0
        %698 = vmatpush2.msra.mxu0 0.0
        %699 = vmatprep.subr.mxu0 0.0
        %700 = vmatpush2.msra.mxu0 0.0
        %701 = vmatprep.subr.mxu0 0.0
        %702 = vmatpush2.msra.mxu0 0.0
        %703 = vmatprep.subr.mxu0 0.0
        %704 = vmatpush2.msra.mxu0 0.0
        %705 = vmatprep.subr.mxu0 0.0
        %706 = vmatpush2.msra.mxu0 0.0
        %707 = vmatprep.subr.mxu0 0.0
        %708 = vmatpush2.msra.mxu0 0.0
        %709 = vmatprep.subr.mxu0 0.0
        %710 = vmatpush2.msra.mxu0 0.0
        %711 = vmatprep.subr.mxu0 0.0
        %712 = vmatpush2.msra.mxu0 0.0
        %713 = vmatprep.subr.mxu0 0.0
        %714 = vmatpush2.msra.mxu0 0.0
        %715 = vmatprep.subr.mxu0 0.0
        %716 = vmatpush2.msra.mxu0 0.0
        %717 = vmatprep.subr.mxu0 0.0
        %718 = vmatpush2.msra.mxu0 0.0
        %719 = vmatprep.subr.mxu0 0.0
        %720 = vmatpush2.msra.mxu0 0.0
        %721 = vmatprep.subr.mxu0 0.0
        %722 = vmatpush2.msra.mxu0 0.0
        %723 = vmatprep.subr.mxu0 0.0
        %724 = vmatpush2.msra.mxu0 0.0
        %725 = vmatprep.subr.mxu0 0.0
        %726 = vmatpush2.msra.mxu0 0.0
        %727 = vmatprep.mubr.f32.mxu0 0.0
        %728 = vmatmul.mubr.f32.gmra.mxu0 %v658
        %v729 = vpop.f32.mrf.mxu0
        %v730 = vadd.f32 0.0, %v729
        %v731 = vpop.f32.mrf.mxu0
        %732 = vmatprep.mubr.f32.mxu0 0.0
        %733 = vmatmul.mubr.f32.gmra.mxu0 %v661
        %v734 = vpop.f32.mrf.mxu0
        %v735 = vadd.f32 0.0, %v734
        %v736 = vpop.f32.mrf.mxu0
        %737 = vdwg.mxu0
        %s738 = scalar_lea.vmem [#allocation5], 16
        %v739 = vld [vmem:[%s738] sm:$0xff]
        %v740 = vld [vmem:[%s738 + $0x8] sm:$0xff]
        %v742 = vsel %vm321, %v739, 0
        %v745 = vsel %vm321, %v740, 0
        %747 = vmatprep.subr.mxu0 0.0
        %748 = vmatpush1.msra.mxu0 0.0
        %749 = vmatprep.subr.mxu0 0.0
        %750 = vmatpush1.msra.mxu0 0.0
        %751 = vmatprep.subr.mxu0 0.0
        %752 = vmatpush1.msra.mxu0 0.0
        %753 = vmatprep.subr.mxu0 0.0
        %754 = vmatpush1.msra.mxu0 0.0
        %755 = vmatprep.subr.mxu0 0.0
        %756 = vmatpush1.msra.mxu0 0.0
        %757 = vmatprep.subr.mxu0 0.0
        %758 = vmatpush1.msra.mxu0 0.0
        %759 = vmatprep.subr.mxu0 0.0
        %760 = vmatpush1.msra.mxu0 0.0
        %761 = vmatprep.subr.mxu0 0.0
        %762 = vmatpush1.msra.mxu0 0.0
        %763 = vmatprep.subr.mxu0 0.0
        %764 = vmatpush1.msra.mxu0 0.0
        %765 = vmatprep.subr.mxu0 0.0
        %766 = vmatpush1.msra.mxu0 0.0
        %767 = vmatprep.subr.mxu0 0.0
        %768 = vmatpush1.msra.mxu0 0.0
        %769 = vmatprep.subr.mxu0 0.0
        %770 = vmatpush1.msra.mxu0 0.0
        %771 = vmatprep.subr.mxu0 0.0
        %772 = vmatpush1.msra.mxu0 0.0
        %773 = vmatprep.subr.mxu0 0.0
        %774 = vmatpush1.msra.mxu0 0.0
        %775 = vmatprep.subr.mxu0 0.0
        %776 = vmatpush1.msra.mxu0 %v318
        %777 = vmatprep.subr.mxu0 0.0
        %778 = vmatpush1.msra.mxu0 %v317
        %779 = vmatprep.subr.mxu0 0.0
        %780 = vmatpush2.msra.mxu0 0.0
        %781 = vmatprep.subr.mxu0 0.0
        %782 = vmatpush2.msra.mxu0 0.0
        %783 = vmatprep.subr.mxu0 0.0
        %784 = vmatpush2.msra.mxu0 0.0
        %785 = vmatprep.subr.mxu0 0.0
        %786 = vmatpush2.msra.mxu0 0.0
        %787 = vmatprep.subr.mxu0 0.0
        %788 = vmatpush2.msra.mxu0 0.0
        %789 = vmatprep.subr.mxu0 0.0
        %790 = vmatpush2.msra.mxu0 0.0
        %791 = vmatprep.subr.mxu0 0.0
        %792 = vmatpush2.msra.mxu0 0.0
        %793 = vmatprep.subr.mxu0 0.0
        %794 = vmatpush2.msra.mxu0 0.0
        %795 = vmatprep.subr.mxu0 0.0
        %796 = vmatpush2.msra.mxu0 0.0
        %797 = vmatprep.subr.mxu0 0.0
        %798 = vmatpush2.msra.mxu0 0.0
        %799 = vmatprep.subr.mxu0 0.0
        %800 = vmatpush2.msra.mxu0 0.0
        %801 = vmatprep.subr.mxu0 0.0
        %802 = vmatpush2.msra.mxu0 0.0
        %803 = vmatprep.subr.mxu0 0.0
        %804 = vmatpush2.msra.mxu0 0.0
        %805 = vmatprep.subr.mxu0 0.0
        %806 = vmatpush2.msra.mxu0 0.0
        %807 = vmatprep.subr.mxu0 0.0
        %808 = vmatpush2.msra.mxu0 0.0
        %809 = vmatprep.subr.mxu0 0.0
        %810 = vmatpush2.msra.mxu0 0.0
        %811 = vmatprep.mubr.f32.mxu0 0.0
        %812 = vmatmul.mubr.f32.gmra.mxu0 %v742
        %v813 = vpop.f32.mrf.mxu0
        %v814 = vadd.f32 0.0, %v813
        %v815 = vpop.f32.mrf.mxu0
        %816 = vmatprep.mubr.f32.mxu0 0.0
        %817 = vmatmul.mubr.f32.gmra.mxu0 %v745
        %v818 = vpop.f32.mrf.mxu0
        %v819 = vadd.f32 0.0, %v818
        %v820 = vpop.f32.mrf.mxu0
        %821 = vdwg.mxu0
        %s822 = scalar_lea.vmem [#allocation7], 16
        %v823 = vld [vmem:[%s822] sm:$0xff]
        %v824 = vld [vmem:[%s822 + $0x8] sm:$0xff]
        %s825 = scalar_lea.vmem [#allocation8], 16
        %v826 = vld [vmem:[%s825] sm:$0xff]
        %v827 = vld [vmem:[%s825 + $0x8] sm:$0xff]
        %v829 = vsel %vm321, %v814, 0
        %v832 = vsel %vm321, %v819, 0
        %834 = vmatprep.subr.mxu0 0.0
        %835 = vmatpush1.msra.mxu0 0.0
        %836 = vmatprep.subr.mxu0 0.0
        %837 = vmatpush1.msra.mxu0 0.0
        %838 = vmatprep.subr.mxu0 0.0
        %839 = vmatpush1.msra.mxu0 0.0
        %840 = vmatprep.subr.mxu0 0.0
        %841 = vmatpush1.msra.mxu0 0.0
        %842 = vmatprep.subr.mxu0 0.0
        %843 = vmatpush1.msra.mxu0 0.0
        %844 = vmatprep.subr.mxu0 0.0
        %845 = vmatpush1.msra.mxu0 0.0
        %846 = vmatprep.subr.mxu0 0.0
        %847 = vmatpush1.msra.mxu0 0.0
        %848 = vmatprep.subr.mxu0 0.0
        %849 = vmatpush1.msra.mxu0 0.0
        %850 = vmatprep.subr.mxu0 0.0
        %851 = vmatpush1.msra.mxu0 0.0
        %852 = vmatprep.subr.mxu0 0.0
        %853 = vmatpush1.msra.mxu0 0.0
        %854 = vmatprep.subr.mxu0 0.0
        %855 = vmatpush1.msra.mxu0 0.0
        %856 = vmatprep.subr.mxu0 0.0
        %857 = vmatpush1.msra.mxu0 0.0
        %858 = vmatprep.subr.mxu0 0.0
        %859 = vmatpush1.msra.mxu0 0.0
        %860 = vmatprep.subr.mxu0 0.0
        %861 = vmatpush1.msra.mxu0 0.0
        %862 = vmatprep.subr.mxu0 0.0
        %863 = vmatpush1.msra.mxu0 %v827
        %864 = vmatprep.subr.mxu0 0.0
        %865 = vmatpush1.msra.mxu0 %v826
        %866 = vmatprep.subr.mxu0 0.0
        %867 = vmatpush2.msra.mxu0 0.0
        %868 = vmatprep.subr.mxu0 0.0
        %869 = vmatpush2.msra.mxu0 0.0
        %870 = vmatprep.subr.mxu0 0.0
        %871 = vmatpush2.msra.mxu0 0.0
        %872 = vmatprep.subr.mxu0 0.0
        %873 = vmatpush2.msra.mxu0 0.0
        %874 = vmatprep.subr.mxu0 0.0
        %875 = vmatpush2.msra.mxu0 0.0
        %876 = vmatprep.subr.mxu0 0.0
        %877 = vmatpush2.msra.mxu0 0.0
        %878 = vmatprep.subr.mxu0 0.0
        %879 = vmatpush2.msra.mxu0 0.0
        %880 = vmatprep.subr.mxu0 0.0
        %881 = vmatpush2.msra.mxu0 0.0
        %882 = vmatprep.subr.mxu0 0.0
        %883 = vmatpush2.msra.mxu0 0.0
        %884 = vmatprep.subr.mxu0 0.0
        %885 = vmatpush2.msra.mxu0 0.0
        %886 = vmatprep.subr.mxu0 0.0
        %887 = vmatpush2.msra.mxu0 0.0
        %888 = vmatprep.subr.mxu0 0.0
        %889 = vmatpush2.msra.mxu0 0.0
        %890 = vmatprep.subr.mxu0 0.0
        %891 = vmatpush2.msra.mxu0 0.0
        %892 = vmatprep.subr.mxu0 0.0
        %893 = vmatpush2.msra.mxu0 0.0
        %894 = vmatprep.subr.mxu0 0.0
        %895 = vmatpush2.msra.mxu0 0.0
        %896 = vmatprep.subr.mxu0 0.0
        %897 = vmatpush2.msra.mxu0 0.0
        %898 = vmatprep.mubr.f32.mxu0 0.0
        %899 = vmatmul.mubr.f32.gmra.mxu0 %v829
        %v900 = vpop.f32.mrf.mxu0
        %v901 = vadd.f32 0.0, %v900
        %v902 = vpop.f32.mrf.mxu0
        %903 = vmatprep.mubr.f32.mxu0 0.0
        %904 = vmatmul.mubr.f32.gmra.mxu0 %v832
        %v905 = vpop.f32.mrf.mxu0
        %v906 = vadd.f32 0.0, %v905
        %v907 = vpop.f32.mrf.mxu0
        %908 = vdwg.mxu0
        %v910 = vsel %vm321, %v730, 0
        %v913 = vsel %vm321, %v735, 0
        %915 = vmatprep.subr.mxu0 0.0
        %916 = vmatpush1.msra.mxu0 0.0
        %917 = vmatprep.subr.mxu0 0.0
        %918 = vmatpush1.msra.mxu0 0.0
        %919 = vmatprep.subr.mxu0 0.0
        %920 = vmatpush1.msra.mxu0 0.0
        %921 = vmatprep.subr.mxu0 0.0
        %922 = vmatpush1.msra.mxu0 0.0
        %923 = vmatprep.subr.mxu0 0.0
        %924 = vmatpush1.msra.mxu0 0.0
        %925 = vmatprep.subr.mxu0 0.0
        %926 = vmatpush1.msra.mxu0 0.0
        %927 = vmatprep.subr.mxu0 0.0
        %928 = vmatpush1.msra.mxu0 0.0
        %929 = vmatprep.subr.mxu0 0.0
        %930 = vmatpush1.msra.mxu0 0.0
        %931 = vmatprep.subr.mxu0 0.0
        %932 = vmatpush1.msra.mxu0 0.0
        %933 = vmatprep.subr.mxu0 0.0
        %934 = vmatpush1.msra.mxu0 0.0
        %935 = vmatprep.subr.mxu0 0.0
        %936 = vmatpush1.msra.mxu0 0.0
        %937 = vmatprep.subr.mxu0 0.0
        %938 = vmatpush1.msra.mxu0 0.0
        %939 = vmatprep.subr.mxu0 0.0
        %940 = vmatpush1.msra.mxu0 0.0
        %941 = vmatprep.subr.mxu0 0.0
        %942 = vmatpush1.msra.mxu0 0.0
        %943 = vmatprep.subr.mxu0 0.0
        %944 = vmatpush1.msra.mxu0 %v824
        %945 = vmatprep.subr.mxu0 0.0
        %946 = vmatpush1.msra.mxu0 %v823
        %947 = vmatprep.subr.mxu0 0.0
        %948 = vmatpush2.msra.mxu0 0.0
        %949 = vmatprep.subr.mxu0 0.0
        %950 = vmatpush2.msra.mxu0 0.0
        %951 = vmatprep.subr.mxu0 0.0
        %952 = vmatpush2.msra.mxu0 0.0
        %953 = vmatprep.subr.mxu0 0.0
        %954 = vmatpush2.msra.mxu0 0.0
        %955 = vmatprep.subr.mxu0 0.0
        %956 = vmatpush2.msra.mxu0 0.0
        %957 = vmatprep.subr.mxu0 0.0
        %958 = vmatpush2.msra.mxu0 0.0
        %959 = vmatprep.subr.mxu0 0.0
        %960 = vmatpush2.msra.mxu0 0.0
        %961 = vmatprep.subr.mxu0 0.0
        %962 = vmatpush2.msra.mxu0 0.0
        %963 = vmatprep.subr.mxu0 0.0
        %964 = vmatpush2.msra.mxu0 0.0
        %965 = vmatprep.subr.mxu0 0.0
        %966 = vmatpush2.msra.mxu0 0.0
        %967 = vmatprep.subr.mxu0 0.0
        %968 = vmatpush2.msra.mxu0 0.0
        %969 = vmatprep.subr.mxu0 0.0
        %970 = vmatpush2.msra.mxu0 0.0
        %971 = vmatprep.subr.mxu0 0.0
        %972 = vmatpush2.msra.mxu0 0.0
        %973 = vmatprep.subr.mxu0 0.0
        %974 = vmatpush2.msra.mxu0 0.0
        %975 = vmatprep.subr.mxu0 0.0
        %976 = vmatpush2.msra.mxu0 0.0
        %977 = vmatprep.subr.mxu0 0.0
        %978 = vmatpush2.msra.mxu0 0.0
        %979 = vmatprep.mubr.f32.mxu0 0.0
        %980 = vmatmul.mubr.f32.gmra.mxu0 %v910
        %v981 = vpop.f32.mrf.mxu0
        %v982 = vadd.f32 %v901, %v981
        %v983 = vpop.f32.mrf.mxu0
        %984 = vmatprep.mubr.f32.mxu0 0.0
        %985 = vmatmul.mubr.f32.gmra.mxu0 %v913
        %v986 = vpop.f32.mrf.mxu0
        %v987 = vadd.f32 %v906, %v986
        %v988 = vpop.f32.mrf.mxu0
        %989 = vdwg.mxu0
        %s990 = scalar_lea.vmem %s316, 16 [#allocation11]
        %991 = vst.msk [vmem:[%s990] sm:$0xff] %vm321, %v982
        %992 = vst.msk [vmem:[%s990 + $0x8] sm:$0xff] %vm321, %v987
        %s993 = scalar_lea.vmem [#allocation2], 32
        %v994 = vld [vmem:[%s993] sm:$0xff]
        %v995 = vld [vmem:[%s993 + $0x8] sm:$0xff]
        %v997 = vsel %vm321, %v994, 0
        %v1000 = vsel %vm321, %v995, 0
        %1002 = vmatprep.subr.mxu0 0.0
        %1003 = vmatpush1.msra.mxu0 0.0
        %1004 = vmatprep.subr.mxu0 0.0
        %1005 = vmatpush1.msra.mxu0 0.0
        %1006 = vmatprep.subr.mxu0 0.0
        %1007 = vmatpush1.msra.mxu0 0.0
        %1008 = vmatprep.subr.mxu0 0.0
        %1009 = vmatpush1.msra.mxu0 0.0
        %1010 = vmatprep.subr.mxu0 0.0
        %1011 = vmatpush1.msra.mxu0 0.0
        %1012 = vmatprep.subr.mxu0 0.0
        %1013 = vmatpush1.msra.mxu0 0.0
        %1014 = vmatprep.subr.mxu0 0.0
        %1015 = vmatpush1.msra.mxu0 0.0
        %1016 = vmatprep.subr.mxu0 0.0
        %1017 = vmatpush1.msra.mxu0 0.0
        %1018 = vmatprep.subr.mxu0 0.0
        %1019 = vmatpush1.msra.mxu0 0.0
        %1020 = vmatprep.subr.mxu0 0.0
        %1021 = vmatpush1.msra.mxu0 0.0
        %1022 = vmatprep.subr.mxu0 0.0
        %1023 = vmatpush1.msra.mxu0 0.0
        %1024 = vmatprep.subr.mxu0 0.0
        %1025 = vmatpush1.msra.mxu0 0.0
        %1026 = vmatprep.subr.mxu0 0.0
        %1027 = vmatpush1.msra.mxu0 0.0
        %1028 = vmatprep.subr.mxu0 0.0
        %1029 = vmatpush1.msra.mxu0 0.0
        %1030 = vmatprep.subr.mxu0 0.0
        %1031 = vmatpush1.msra.mxu0 %v318
        %1032 = vmatprep.subr.mxu0 0.0
        %1033 = vmatpush1.msra.mxu0 %v317
        %1034 = vmatprep.subr.mxu0 0.0
        %1035 = vmatpush2.msra.mxu0 0.0
        %1036 = vmatprep.subr.mxu0 0.0
        %1037 = vmatpush2.msra.mxu0 0.0
        %1038 = vmatprep.subr.mxu0 0.0
        %1039 = vmatpush2.msra.mxu0 0.0
        %1040 = vmatprep.subr.mxu0 0.0
        %1041 = vmatpush2.msra.mxu0 0.0
        %1042 = vmatprep.subr.mxu0 0.0
        %1043 = vmatpush2.msra.mxu0 0.0
        %1044 = vmatprep.subr.mxu0 0.0
        %1045 = vmatpush2.msra.mxu0 0.0
        %1046 = vmatprep.subr.mxu0 0.0
        %1047 = vmatpush2.msra.mxu0 0.0
        %1048 = vmatprep.subr.mxu0 0.0
        %1049 = vmatpush2.msra.mxu0 0.0
        %1050 = vmatprep.subr.mxu0 0.0
        %1051 = vmatpush2.msra.mxu0 0.0
        %1052 = vmatprep.subr.mxu0 0.0
        %1053 = vmatpush2.msra.mxu0 0.0
        %1054 = vmatprep.subr.mxu0 0.0
        %1055 = vmatpush2.msra.mxu0 0.0
        %1056 = vmatprep.subr.mxu0 0.0
        %1057 = vmatpush2.msra.mxu0 0.0
        %1058 = vmatprep.subr.mxu0 0.0
        %1059 = vmatpush2.msra.mxu0 0.0
        %1060 = vmatprep.subr.mxu0 0.0
        %1061 = vmatpush2.msra.mxu0 0.0
        %1062 = vmatprep.subr.mxu0 0.0
        %1063 = vmatpush2.msra.mxu0 0.0
        %1064 = vmatprep.subr.mxu0 0.0
        %1065 = vmatpush2.msra.mxu0 0.0
        %1066 = vmatprep.mubr.f32.mxu0 0.0
        %1067 = vmatmul.mubr.f32.gmra.mxu0 %v997
        %v1068 = vpop.f32.mrf.mxu0
        %v1069 = vadd.f32 0.0, %v1068
        %v1070 = vpop.f32.mrf.mxu0
        %1071 = vmatprep.mubr.f32.mxu0 0.0
        %1072 = vmatmul.mubr.f32.gmra.mxu0 %v1000
        %v1073 = vpop.f32.mrf.mxu0
        %v1074 = vadd.f32 0.0, %v1073
        %v1075 = vpop.f32.mrf.mxu0
        %1076 = vdwg.mxu0
        %s1077 = scalar_lea.vmem [#allocation5], 32
        %v1078 = vld [vmem:[%s1077] sm:$0xff]
        %v1079 = vld [vmem:[%s1077 + $0x8] sm:$0xff]
        %v1081 = vsel %vm321, %v1078, 0
        %v1084 = vsel %vm321, %v1079, 0
        %1086 = vmatprep.subr.mxu0 0.0
        %1087 = vmatpush1.msra.mxu0 0.0
        %1088 = vmatprep.subr.mxu0 0.0
        %1089 = vmatpush1.msra.mxu0 0.0
        %1090 = vmatprep.subr.mxu0 0.0
        %1091 = vmatpush1.msra.mxu0 0.0
        %1092 = vmatprep.subr.mxu0 0.0
        %1093 = vmatpush1.msra.mxu0 0.0
        %1094 = vmatprep.subr.mxu0 0.0
        %1095 = vmatpush1.msra.mxu0 0.0
        %1096 = vmatprep.subr.mxu0 0.0
        %1097 = vmatpush1.msra.mxu0 0.0
        %1098 = vmatprep.subr.mxu0 0.0
        %1099 = vmatpush1.msra.mxu0 0.0
        %1100 = vmatprep.subr.mxu0 0.0
        %1101 = vmatpush1.msra.mxu0 0.0
        %1102 = vmatprep.subr.mxu0 0.0
        %1103 = vmatpush1.msra.mxu0 0.0
        %1104 = vmatprep.subr.mxu0 0.0
        %1105 = vmatpush1.msra.mxu0 0.0
        %1106 = vmatprep.subr.mxu0 0.0
        %1107 = vmatpush1.msra.mxu0 0.0
        %1108 = vmatprep.subr.mxu0 0.0
        %1109 = vmatpush1.msra.mxu0 0.0
        %1110 = vmatprep.subr.mxu0 0.0
        %1111 = vmatpush1.msra.mxu0 0.0
        %1112 = vmatprep.subr.mxu0 0.0
        %1113 = vmatpush1.msra.mxu0 0.0
        %1114 = vmatprep.subr.mxu0 0.0
        %1115 = vmatpush1.msra.mxu0 %v318
        %1116 = vmatprep.subr.mxu0 0.0
        %1117 = vmatpush1.msra.mxu0 %v317
        %1118 = vmatprep.subr.mxu0 0.0
        %1119 = vmatpush2.msra.mxu0 0.0
        %1120 = vmatprep.subr.mxu0 0.0
        %1121 = vmatpush2.msra.mxu0 0.0
        %1122 = vmatprep.subr.mxu0 0.0
        %1123 = vmatpush2.msra.mxu0 0.0
        %1124 = vmatprep.subr.mxu0 0.0
        %1125 = vmatpush2.msra.mxu0 0.0
        %1126 = vmatprep.subr.mxu0 0.0
        %1127 = vmatpush2.msra.mxu0 0.0
        %1128 = vmatprep.subr.mxu0 0.0
        %1129 = vmatpush2.msra.mxu0 0.0
        %1130 = vmatprep.subr.mxu0 0.0
        %1131 = vmatpush2.msra.mxu0 0.0
        %1132 = vmatprep.subr.mxu0 0.0
        %1133 = vmatpush2.msra.mxu0 0.0
        %1134 = vmatprep.subr.mxu0 0.0
        %1135 = vmatpush2.msra.mxu0 0.0
        %1136 = vmatprep.subr.mxu0 0.0
        %1137 = vmatpush2.msra.mxu0 0.0
        %1138 = vmatprep.subr.mxu0 0.0
        %1139 = vmatpush2.msra.mxu0 0.0
        %1140 = vmatprep.subr.mxu0 0.0
        %1141 = vmatpush2.msra.mxu0 0.0
        %1142 = vmatprep.subr.mxu0 0.0
        %1143 = vmatpush2.msra.mxu0 0.0
        %1144 = vmatprep.subr.mxu0 0.0
        %1145 = vmatpush2.msra.mxu0 0.0
        %1146 = vmatprep.subr.mxu0 0.0
        %1147 = vmatpush2.msra.mxu0 0.0
        %1148 = vmatprep.subr.mxu0 0.0
        %1149 = vmatpush2.msra.mxu0 0.0
        %1150 = vmatprep.mubr.f32.mxu0 0.0
        %1151 = vmatmul.mubr.f32.gmra.mxu0 %v1081
        %v1152 = vpop.f32.mrf.mxu0
        %v1153 = vadd.f32 0.0, %v1152
        %v1154 = vpop.f32.mrf.mxu0
        %1155 = vmatprep.mubr.f32.mxu0 0.0
        %1156 = vmatmul.mubr.f32.gmra.mxu0 %v1084
        %v1157 = vpop.f32.mrf.mxu0
        %v1158 = vadd.f32 0.0, %v1157
        %v1159 = vpop.f32.mrf.mxu0
        %1160 = vdwg.mxu0
        %s1161 = scalar_lea.vmem [#allocation7], 32
        %v1162 = vld [vmem:[%s1161] sm:$0xff]
        %v1163 = vld [vmem:[%s1161 + $0x8] sm:$0xff]
        %s1164 = scalar_lea.vmem [#allocation8], 32
        %v1165 = vld [vmem:[%s1164] sm:$0xff]
        %v1166 = vld [vmem:[%s1164 + $0x8] sm:$0xff]
        %v1168 = vsel %vm321, %v1153, 0
        %v1171 = vsel %vm321, %v1158, 0
        %1173 = vmatprep.subr.mxu0 0.0
        %1174 = vmatpush1.msra.mxu0 0.0
        %1175 = vmatprep.subr.mxu0 0.0
        %1176 = vmatpush1.msra.mxu0 0.0
        %1177 = vmatprep.subr.mxu0 0.0
        %1178 = vmatpush1.msra.mxu0 0.0
        %1179 = vmatprep.subr.mxu0 0.0
        %1180 = vmatpush1.msra.mxu0 0.0
        %1181 = vmatprep.subr.mxu0 0.0
        %1182 = vmatpush1.msra.mxu0 0.0
        %1183 = vmatprep.subr.mxu0 0.0
        %1184 = vmatpush1.msra.mxu0 0.0
        %1185 = vmatprep.subr.mxu0 0.0
        %1186 = vmatpush1.msra.mxu0 0.0
        %1187 = vmatprep.subr.mxu0 0.0
        %1188 = vmatpush1.msra.mxu0 0.0
        %1189 = vmatprep.subr.mxu0 0.0
        %1190 = vmatpush1.msra.mxu0 0.0
        %1191 = vmatprep.subr.mxu0 0.0
        %1192 = vmatpush1.msra.mxu0 0.0
        %1193 = vmatprep.subr.mxu0 0.0
        %1194 = vmatpush1.msra.mxu0 0.0
        %1195 = vmatprep.subr.mxu0 0.0
        %1196 = vmatpush1.msra.mxu0 0.0
        %1197 = vmatprep.subr.mxu0 0.0
        %1198 = vmatpush1.msra.mxu0 0.0
        %1199 = vmatprep.subr.mxu0 0.0
        %1200 = vmatpush1.msra.mxu0 0.0
        %1201 = vmatprep.subr.mxu0 0.0
        %1202 = vmatpush1.msra.mxu0 %v1166
        %1203 = vmatprep.subr.mxu0 0.0
        %1204 = vmatpush1.msra.mxu0 %v1165
        %1205 = vmatprep.subr.mxu0 0.0
        %1206 = vmatpush2.msra.mxu0 0.0
        %1207 = vmatprep.subr.mxu0 0.0
        %1208 = vmatpush2.msra.mxu0 0.0
        %1209 = vmatprep.subr.mxu0 0.0
        %1210 = vmatpush2.msra.mxu0 0.0
        %1211 = vmatprep.subr.mxu0 0.0
        %1212 = vmatpush2.msra.mxu0 0.0
        %1213 = vmatprep.subr.mxu0 0.0
        %1214 = vmatpush2.msra.mxu0 0.0
        %1215 = vmatprep.subr.mxu0 0.0
        %1216 = vmatpush2.msra.mxu0 0.0
        %1217 = vmatprep.subr.mxu0 0.0
        %1218 = vmatpush2.msra.mxu0 0.0
        %1219 = vmatprep.subr.mxu0 0.0
        %1220 = vmatpush2.msra.mxu0 0.0
        %1221 = vmatprep.subr.mxu0 0.0
        %1222 = vmatpush2.msra.mxu0 0.0
        %1223 = vmatprep.subr.mxu0 0.0
        %1224 = vmatpush2.msra.mxu0 0.0
        %1225 = vmatprep.subr.mxu0 0.0
        %1226 = vmatpush2.msra.mxu0 0.0
        %1227 = vmatprep.subr.mxu0 0.0
        %1228 = vmatpush2.msra.mxu0 0.0
        %1229 = vmatprep.subr.mxu0 0.0
        %1230 = vmatpush2.msra.mxu0 0.0
        %1231 = vmatprep.subr.mxu0 0.0
        %1232 = vmatpush2.msra.mxu0 0.0
        %1233 = vmatprep.subr.mxu0 0.0
        %1234 = vmatpush2.msra.mxu0 0.0
        %1235 = vmatprep.subr.mxu0 0.0
        %1236 = vmatpush2.msra.mxu0 0.0
        %1237 = vmatprep.mubr.f32.mxu0 0.0
        %1238 = vmatmul.mubr.f32.gmra.mxu0 %v1168
        %v1239 = vpop.f32.mrf.mxu0
        %v1240 = vadd.f32 0.0, %v1239
        %v1241 = vpop.f32.mrf.mxu0
        %1242 = vmatprep.mubr.f32.mxu0 0.0
        %1243 = vmatmul.mubr.f32.gmra.mxu0 %v1171
        %v1244 = vpop.f32.mrf.mxu0
        %v1245 = vadd.f32 0.0, %v1244
        %v1246 = vpop.f32.mrf.mxu0
        %1247 = vdwg.mxu0
        %v1249 = vsel %vm321, %v1069, 0
        %v1252 = vsel %vm321, %v1074, 0
        %1254 = vmatprep.subr.mxu0 0.0
        %1255 = vmatpush1.msra.mxu0 0.0
        %1256 = vmatprep.subr.mxu0 0.0
        %1257 = vmatpush1.msra.mxu0 0.0
        %1258 = vmatprep.subr.mxu0 0.0
        %1259 = vmatpush1.msra.mxu0 0.0
        %1260 = vmatprep.subr.mxu0 0.0
        %1261 = vmatpush1.msra.mxu0 0.0
        %1262 = vmatprep.subr.mxu0 0.0
        %1263 = vmatpush1.msra.mxu0 0.0
        %1264 = vmatprep.subr.mxu0 0.0
        %1265 = vmatpush1.msra.mxu0 0.0
        %1266 = vmatprep.subr.mxu0 0.0
        %1267 = vmatpush1.msra.mxu0 0.0
        %1268 = vmatprep.subr.mxu0 0.0
        %1269 = vmatpush1.msra.mxu0 0.0
        %1270 = vmatprep.subr.mxu0 0.0
        %1271 = vmatpush1.msra.mxu0 0.0
        %1272 = vmatprep.subr.mxu0 0.0
        %1273 = vmatpush1.msra.mxu0 0.0
        %1274 = vmatprep.subr.mxu0 0.0
        %1275 = vmatpush1.msra.mxu0 0.0
        %1276 = vmatprep.subr.mxu0 0.0
        %1277 = vmatpush1.msra.mxu0 0.0
        %1278 = vmatprep.subr.mxu0 0.0
        %1279 = vmatpush1.msra.mxu0 0.0
        %1280 = vmatprep.subr.mxu0 0.0
        %1281 = vmatpush1.msra.mxu0 0.0
        %1282 = vmatprep.subr.mxu0 0.0
        %1283 = vmatpush1.msra.mxu0 %v1163
        %1284 = vmatprep.subr.mxu0 0.0
        %1285 = vmatpush1.msra.mxu0 %v1162
        %1286 = vmatprep.subr.mxu0 0.0
        %1287 = vmatpush2.msra.mxu0 0.0
        %1288 = vmatprep.subr.mxu0 0.0
        %1289 = vmatpush2.msra.mxu0 0.0
        %1290 = vmatprep.subr.mxu0 0.0
        %1291 = vmatpush2.msra.mxu0 0.0
        %1292 = vmatprep.subr.mxu0 0.0
        %1293 = vmatpush2.msra.mxu0 0.0
        %1294 = vmatprep.subr.mxu0 0.0
        %1295 = vmatpush2.msra.mxu0 0.0
        %1296 = vmatprep.subr.mxu0 0.0
        %1297 = vmatpush2.msra.mxu0 0.0
        %1298 = vmatprep.subr.mxu0 0.0
        %1299 = vmatpush2.msra.mxu0 0.0
        %1300 = vmatprep.subr.mxu0 0.0
        %1301 = vmatpush2.msra.mxu0 0.0
        %1302 = vmatprep.subr.mxu0 0.0
        %1303 = vmatpush2.msra.mxu0 0.0
        %1304 = vmatprep.subr.mxu0 0.0
        %1305 = vmatpush2.msra.mxu0 0.0
        %1306 = vmatprep.subr.mxu0 0.0
        %1307 = vmatpush2.msra.mxu0 0.0
        %1308 = vmatprep.subr.mxu0 0.0
        %1309 = vmatpush2.msra.mxu0 0.0
        %1310 = vmatprep.subr.mxu0 0.0
        %1311 = vmatpush2.msra.mxu0 0.0
        %1312 = vmatprep.subr.mxu0 0.0
        %1313 = vmatpush2.msra.mxu0 0.0
        %1314 = vmatprep.subr.mxu0 0.0
        %1315 = vmatpush2.msra.mxu0 0.0
        %1316 = vmatprep.subr.mxu0 0.0
        %1317 = vmatpush2.msra.mxu0 0.0
        %1318 = vmatprep.mubr.f32.mxu0 0.0
        %1319 = vmatmul.mubr.f32.gmra.mxu0 %v1249
        %v1320 = vpop.f32.mrf.mxu0
        %v1321 = vadd.f32 %v1240, %v1320
        %v1322 = vpop.f32.mrf.mxu0
        %1323 = vmatprep.mubr.f32.mxu0 0.0
        %1324 = vmatmul.mubr.f32.gmra.mxu0 %v1252
        %v1325 = vpop.f32.mrf.mxu0
        %v1326 = vadd.f32 %v1245, %v1325
        %v1327 = vpop.f32.mrf.mxu0
        %1328 = vdwg.mxu0
        %s1329 = scalar_lea.vmem %s316, 32 [#allocation11]
        %1330 = vst.msk [vmem:[%s1329] sm:$0xff] %vm321, %v1321
        %1331 = vst.msk [vmem:[%s1329 + $0x8] sm:$0xff] %vm321, %v1326
        %s1332 = scalar_lea.vmem [#allocation2], 48
        %v1333 = vld [vmem:[%s1332] sm:$0xff]
        %v1334 = vld [vmem:[%s1332 + $0x8] sm:$0xff]
        %v1336 = vsel %vm321, %v1333, 0
        %v1339 = vsel %vm321, %v1334, 0
        %1341 = vmatprep.subr.mxu0 0.0
        %1342 = vmatpush1.msra.mxu0 0.0
        %1343 = vmatprep.subr.mxu0 0.0
        %1344 = vmatpush1.msra.mxu0 0.0
        %1345 = vmatprep.subr.mxu0 0.0
        %1346 = vmatpush1.msra.mxu0 0.0
        %1347 = vmatprep.subr.mxu0 0.0
        %1348 = vmatpush1.msra.mxu0 0.0
        %1349 = vmatprep.subr.mxu0 0.0
        %1350 = vmatpush1.msra.mxu0 0.0
        %1351 = vmatprep.subr.mxu0 0.0
        %1352 = vmatpush1.msra.mxu0 0.0
        %1353 = vmatprep.subr.mxu0 0.0
        %1354 = vmatpush1.msra.mxu0 0.0
        %1355 = vmatprep.subr.mxu0 0.0
        %1356 = vmatpush1.msra.mxu0 0.0
        %1357 = vmatprep.subr.mxu0 0.0
        %1358 = vmatpush1.msra.mxu0 0.0
        %1359 = vmatprep.subr.mxu0 0.0
        %1360 = vmatpush1.msra.mxu0 0.0
        %1361 = vmatprep.subr.mxu0 0.0
        %1362 = vmatpush1.msra.mxu0 0.0
        %1363 = vmatprep.subr.mxu0 0.0
        %1364 = vmatpush1.msra.mxu0 0.0
        %1365 = vmatprep.subr.mxu0 0.0
        %1366 = vmatpush1.msra.mxu0 0.0
        %1367 = vmatprep.subr.mxu0 0.0
        %1368 = vmatpush1.msra.mxu0 0.0
        %1369 = vmatprep.subr.mxu0 0.0
        %1370 = vmatpush1.msra.mxu0 %v318
        %1371 = vmatprep.subr.mxu0 0.0
        %1372 = vmatpush1.msra.mxu0 %v317
        %1373 = vmatprep.subr.mxu0 0.0
        %1374 = vmatpush2.msra.mxu0 0.0
        %1375 = vmatprep.subr.mxu0 0.0
        %1376 = vmatpush2.msra.mxu0 0.0
        %1377 = vmatprep.subr.mxu0 0.0
        %1378 = vmatpush2.msra.mxu0 0.0
        %1379 = vmatprep.subr.mxu0 0.0
        %1380 = vmatpush2.msra.mxu0 0.0
        %1381 = vmatprep.subr.mxu0 0.0
        %1382 = vmatpush2.msra.mxu0 0.0
        %1383 = vmatprep.subr.mxu0 0.0
        %1384 = vmatpush2.msra.mxu0 0.0
        %1385 = vmatprep.subr.mxu0 0.0
        %1386 = vmatpush2.msra.mxu0 0.0
        %1387 = vmatprep.subr.mxu0 0.0
        %1388 = vmatpush2.msra.mxu0 0.0
        %1389 = vmatprep.subr.mxu0 0.0
        %1390 = vmatpush2.msra.mxu0 0.0
        %1391 = vmatprep.subr.mxu0 0.0
        %1392 = vmatpush2.msra.mxu0 0.0
        %1393 = vmatprep.subr.mxu0 0.0
        %1394 = vmatpush2.msra.mxu0 0.0
        %1395 = vmatprep.subr.mxu0 0.0
        %1396 = vmatpush2.msra.mxu0 0.0
        %1397 = vmatprep.subr.mxu0 0.0
        %1398 = vmatpush2.msra.mxu0 0.0
        %1399 = vmatprep.subr.mxu0 0.0
        %1400 = vmatpush2.msra.mxu0 0.0
        %1401 = vmatprep.subr.mxu0 0.0
        %1402 = vmatpush2.msra.mxu0 0.0
        %1403 = vmatprep.subr.mxu0 0.0
        %1404 = vmatpush2.msra.mxu0 0.0
        %1405 = vmatprep.mubr.f32.mxu0 0.0
        %1406 = vmatmul.mubr.f32.gmra.mxu0 %v1336
        %v1407 = vpop.f32.mrf.mxu0
        %v1408 = vadd.f32 0.0, %v1407
        %v1409 = vpop.f32.mrf.mxu0
        %1410 = vmatprep.mubr.f32.mxu0 0.0
        %1411 = vmatmul.mubr.f32.gmra.mxu0 %v1339
        %v1412 = vpop.f32.mrf.mxu0
        %v1413 = vadd.f32 0.0, %v1412
        %v1414 = vpop.f32.mrf.mxu0
        %1415 = vdwg.mxu0
        %s1416 = scalar_lea.vmem [#allocation5], 48
        %v1417 = vld [vmem:[%s1416] sm:$0xff]
        %v1418 = vld [vmem:[%s1416 + $0x8] sm:$0xff]
        %v1420 = vsel %vm321, %v1417, 0
        %v1423 = vsel %vm321, %v1418, 0
        %1425 = vmatprep.subr.mxu0 0.0
        %1426 = vmatpush1.msra.mxu0 0.0
        %1427 = vmatprep.subr.mxu0 0.0
        %1428 = vmatpush1.msra.mxu0 0.0
        %1429 = vmatprep.subr.mxu0 0.0
        %1430 = vmatpush1.msra.mxu0 0.0
        %1431 = vmatprep.subr.mxu0 0.0
        %1432 = vmatpush1.msra.mxu0 0.0
        %1433 = vmatprep.subr.mxu0 0.0
        %1434 = vmatpush1.msra.mxu0 0.0
        %1435 = vmatprep.subr.mxu0 0.0
        %1436 = vmatpush1.msra.mxu0 0.0
        %1437 = vmatprep.subr.mxu0 0.0
        %1438 = vmatpush1.msra.mxu0 0.0
        %1439 = vmatprep.subr.mxu0 0.0
        %1440 = vmatpush1.msra.mxu0 0.0
        %1441 = vmatprep.subr.mxu0 0.0
        %1442 = vmatpush1.msra.mxu0 0.0
        %1443 = vmatprep.subr.mxu0 0.0
        %1444 = vmatpush1.msra.mxu0 0.0
        %1445 = vmatprep.subr.mxu0 0.0
        %1446 = vmatpush1.msra.mxu0 0.0
        %1447 = vmatprep.subr.mxu0 0.0
        %1448 = vmatpush1.msra.mxu0 0.0
        %1449 = vmatprep.subr.mxu0 0.0
        %1450 = vmatpush1.msra.mxu0 0.0
        %1451 = vmatprep.subr.mxu0 0.0
        %1452 = vmatpush1.msra.mxu0 0.0
        %1453 = vmatprep.subr.mxu0 0.0
        %1454 = vmatpush1.msra.mxu0 %v318
        %1455 = vmatprep.subr.mxu0 0.0
        %1456 = vmatpush1.msra.mxu0 %v317
        %1457 = vmatprep.subr.mxu0 0.0
        %1458 = vmatpush2.msra.mxu0 0.0
        %1459 = vmatprep.subr.mxu0 0.0
        %1460 = vmatpush2.msra.mxu0 0.0
        %1461 = vmatprep.subr.mxu0 0.0
        %1462 = vmatpush2.msra.mxu0 0.0
        %1463 = vmatprep.subr.mxu0 0.0
        %1464 = vmatpush2.msra.mxu0 0.0
        %1465 = vmatprep.subr.mxu0 0.0
        %1466 = vmatpush2.msra.mxu0 0.0
        %1467 = vmatprep.subr.mxu0 0.0
        %1468 = vmatpush2.msra.mxu0 0.0
        %1469 = vmatprep.subr.mxu0 0.0
        %1470 = vmatpush2.msra.mxu0 0.0
        %1471 = vmatprep.subr.mxu0 0.0
        %1472 = vmatpush2.msra.mxu0 0.0
        %1473 = vmatprep.subr.mxu0 0.0
        %1474 = vmatpush2.msra.mxu0 0.0
        %1475 = vmatprep.subr.mxu0 0.0
        %1476 = vmatpush2.msra.mxu0 0.0
        %1477 = vmatprep.subr.mxu0 0.0
        %1478 = vmatpush2.msra.mxu0 0.0
        %1479 = vmatprep.subr.mxu0 0.0
        %1480 = vmatpush2.msra.mxu0 0.0
        %1481 = vmatprep.subr.mxu0 0.0
        %1482 = vmatpush2.msra.mxu0 0.0
        %1483 = vmatprep.subr.mxu0 0.0
        %1484 = vmatpush2.msra.mxu0 0.0
        %1485 = vmatprep.subr.mxu0 0.0
        %1486 = vmatpush2.msra.mxu0 0.0
        %1487 = vmatprep.subr.mxu0 0.0
        %1488 = vmatpush2.msra.mxu0 0.0
        %1489 = vmatprep.mubr.f32.mxu0 0.0
        %1490 = vmatmul.mubr.f32.gmra.mxu0 %v1420
        %v1491 = vpop.f32.mrf.mxu0
        %v1492 = vadd.f32 0.0, %v1491
        %v1493 = vpop.f32.mrf.mxu0
        %1494 = vmatprep.mubr.f32.mxu0 0.0
        %1495 = vmatmul.mubr.f32.gmra.mxu0 %v1423
        %v1496 = vpop.f32.mrf.mxu0
        %v1497 = vadd.f32 0.0, %v1496
        %v1498 = vpop.f32.mrf.mxu0
        %1499 = vdwg.mxu0
        %s1500 = scalar_lea.vmem [#allocation7], 48
        %v1501 = vld [vmem:[%s1500] sm:$0xff]
        %v1502 = vld [vmem:[%s1500 + $0x8] sm:$0xff]
        %s1503 = scalar_lea.vmem [#allocation8], 48
        %v1504 = vld [vmem:[%s1503] sm:$0xff]
        %v1505 = vld [vmem:[%s1503 + $0x8] sm:$0xff]
        %v1507 = vsel %vm321, %v1492, 0
        %v1510 = vsel %vm321, %v1497, 0
        %1512 = vmatprep.subr.mxu0 0.0
        %1513 = vmatpush1.msra.mxu0 0.0
        %1514 = vmatprep.subr.mxu0 0.0
        %1515 = vmatpush1.msra.mxu0 0.0
        %1516 = vmatprep.subr.mxu0 0.0
        %1517 = vmatpush1.msra.mxu0 0.0
        %1518 = vmatprep.subr.mxu0 0.0
        %1519 = vmatpush1.msra.mxu0 0.0
        %1520 = vmatprep.subr.mxu0 0.0
        %1521 = vmatpush1.msra.mxu0 0.0
        %1522 = vmatprep.subr.mxu0 0.0
        %1523 = vmatpush1.msra.mxu0 0.0
        %1524 = vmatprep.subr.mxu0 0.0
        %1525 = vmatpush1.msra.mxu0 0.0
        %1526 = vmatprep.subr.mxu0 0.0
        %1527 = vmatpush1.msra.mxu0 0.0
        %1528 = vmatprep.subr.mxu0 0.0
        %1529 = vmatpush1.msra.mxu0 0.0
        %1530 = vmatprep.subr.mxu0 0.0
        %1531 = vmatpush1.msra.mxu0 0.0
        %1532 = vmatprep.subr.mxu0 0.0
        %1533 = vmatpush1.msra.mxu0 0.0
        %1534 = vmatprep.subr.mxu0 0.0
        %1535 = vmatpush1.msra.mxu0 0.0
        %1536 = vmatprep.subr.mxu0 0.0
        %1537 = vmatpush1.msra.mxu0 0.0
        %1538 = vmatprep.subr.mxu0 0.0
        %1539 = vmatpush1.msra.mxu0 0.0
        %1540 = vmatprep.subr.mxu0 0.0
        %1541 = vmatpush1.msra.mxu0 %v1505
        %1542 = vmatprep.subr.mxu0 0.0
        %1543 = vmatpush1.msra.mxu0 %v1504
        %1544 = vmatprep.subr.mxu0 0.0
        %1545 = vmatpush2.msra.mxu0 0.0
        %1546 = vmatprep.subr.mxu0 0.0
        %1547 = vmatpush2.msra.mxu0 0.0
        %1548 = vmatprep.subr.mxu0 0.0
        %1549 = vmatpush2.msra.mxu0 0.0
        %1550 = vmatprep.subr.mxu0 0.0
        %1551 = vmatpush2.msra.mxu0 0.0
        %1552 = vmatprep.subr.mxu0 0.0
        %1553 = vmatpush2.msra.mxu0 0.0
        %1554 = vmatprep.subr.mxu0 0.0
        %1555 = vmatpush2.msra.mxu0 0.0
        %1556 = vmatprep.subr.mxu0 0.0
        %1557 = vmatpush2.msra.mxu0 0.0
        %1558 = vmatprep.subr.mxu0 0.0
        %1559 = vmatpush2.msra.mxu0 0.0
        %1560 = vmatprep.subr.mxu0 0.0
        %1561 = vmatpush2.msra.mxu0 0.0
        %1562 = vmatprep.subr.mxu0 0.0
        %1563 = vmatpush2.msra.mxu0 0.0
        %1564 = vmatprep.subr.mxu0 0.0
        %1565 = vmatpush2.msra.mxu0 0.0
        %1566 = vmatprep.subr.mxu0 0.0
        %1567 = vmatpush2.msra.mxu0 0.0
        %1568 = vmatprep.subr.mxu0 0.0
        %1569 = vmatpush2.msra.mxu0 0.0
        %1570 = vmatprep.subr.mxu0 0.0
        %1571 = vmatpush2.msra.mxu0 0.0
        %1572 = vmatprep.subr.mxu0 0.0
        %1573 = vmatpush2.msra.mxu0 0.0
        %1574 = vmatprep.subr.mxu0 0.0
        %1575 = vmatpush2.msra.mxu0 0.0
        %1576 = vmatprep.mubr.f32.mxu0 0.0
        %1577 = vmatmul.mubr.f32.gmra.mxu0 %v1507
        %v1578 = vpop.f32.mrf.mxu0
        %v1579 = vadd.f32 0.0, %v1578
        %v1580 = vpop.f32.mrf.mxu0
        %1581 = vmatprep.mubr.f32.mxu0 0.0
        %1582 = vmatmul.mubr.f32.gmra.mxu0 %v1510
        %v1583 = vpop.f32.mrf.mxu0
        %v1584 = vadd.f32 0.0, %v1583
        %v1585 = vpop.f32.mrf.mxu0
        %1586 = vdwg.mxu0
        %v1588 = vsel %vm321, %v1408, 0
        %v1591 = vsel %vm321, %v1413, 0
        %1593 = vmatprep.subr.mxu0 0.0
        %1594 = vmatpush1.msra.mxu0 0.0
        %1595 = vmatprep.subr.mxu0 0.0
        %1596 = vmatpush1.msra.mxu0 0.0
        %1597 = vmatprep.subr.mxu0 0.0
        %1598 = vmatpush1.msra.mxu0 0.0
        %1599 = vmatprep.subr.mxu0 0.0
        %1600 = vmatpush1.msra.mxu0 0.0
        %1601 = vmatprep.subr.mxu0 0.0
        %1602 = vmatpush1.msra.mxu0 0.0
        %1603 = vmatprep.subr.mxu0 0.0
        %1604 = vmatpush1.msra.mxu0 0.0
        %1605 = vmatprep.subr.mxu0 0.0
        %1606 = vmatpush1.msra.mxu0 0.0
        %1607 = vmatprep.subr.mxu0 0.0
        %1608 = vmatpush1.msra.mxu0 0.0
        %1609 = vmatprep.subr.mxu0 0.0
        %1610 = vmatpush1.msra.mxu0 0.0
        %1611 = vmatprep.subr.mxu0 0.0
        %1612 = vmatpush1.msra.mxu0 0.0
        %1613 = vmatprep.subr.mxu0 0.0
        %1614 = vmatpush1.msra.mxu0 0.0
        %1615 = vmatprep.subr.mxu0 0.0
        %1616 = vmatpush1.msra.mxu0 0.0
        %1617 = vmatprep.subr.mxu0 0.0
        %1618 = vmatpush1.msra.mxu0 0.0
        %1619 = vmatprep.subr.mxu0 0.0
        %1620 = vmatpush1.msra.mxu0 0.0
        %1621 = vmatprep.subr.mxu0 0.0
        %1622 = vmatpush1.msra.mxu0 %v1502
        %1623 = vmatprep.subr.mxu0 0.0
        %1624 = vmatpush1.msra.mxu0 %v1501
        %1625 = vmatprep.subr.mxu0 0.0
        %1626 = vmatpush2.msra.mxu0 0.0
        %1627 = vmatprep.subr.mxu0 0.0
        %1628 = vmatpush2.msra.mxu0 0.0
        %1629 = vmatprep.subr.mxu0 0.0
        %1630 = vmatpush2.msra.mxu0 0.0
        %1631 = vmatprep.subr.mxu0 0.0
        %1632 = vmatpush2.msra.mxu0 0.0
        %1633 = vmatprep.subr.mxu0 0.0
        %1634 = vmatpush2.msra.mxu0 0.0
        %1635 = vmatprep.subr.mxu0 0.0
        %1636 = vmatpush2.msra.mxu0 0.0
        %1637 = vmatprep.subr.mxu0 0.0
        %1638 = vmatpush2.msra.mxu0 0.0
        %1639 = vmatprep.subr.mxu0 0.0
        %1640 = vmatpush2.msra.mxu0 0.0
        %1641 = vmatprep.subr.mxu0 0.0
        %1642 = vmatpush2.msra.mxu0 0.0
        %1643 = vmatprep.subr.mxu0 0.0
        %1644 = vmatpush2.msra.mxu0 0.0
        %1645 = vmatprep.subr.mxu0 0.0
        %1646 = vmatpush2.msra.mxu0 0.0
        %1647 = vmatprep.subr.mxu0 0.0
        %1648 = vmatpush2.msra.mxu0 0.0
        %1649 = vmatprep.subr.mxu0 0.0
        %1650 = vmatpush2.msra.mxu0 0.0
        %1651 = vmatprep.subr.mxu0 0.0
        %1652 = vmatpush2.msra.mxu0 0.0
        %1653 = vmatprep.subr.mxu0 0.0
        %1654 = vmatpush2.msra.mxu0 0.0
        %1655 = vmatprep.subr.mxu0 0.0
        %1656 = vmatpush2.msra.mxu0 0.0
        %1657 = vmatprep.mubr.f32.mxu0 0.0
        %1658 = vmatmul.mubr.f32.gmra.mxu0 %v1588
        %v1659 = vpop.f32.mrf.mxu0
        %v1660 = vadd.f32 %v1579, %v1659
        %v1661 = vpop.f32.mrf.mxu0
        %1662 = vmatprep.mubr.f32.mxu0 0.0
        %1663 = vmatmul.mubr.f32.gmra.mxu0 %v1591
        %v1664 = vpop.f32.mrf.mxu0
        %v1665 = vadd.f32 %v1584, %v1664
        %v1666 = vpop.f32.mrf.mxu0
        %1667 = vdwg.mxu0
        %s1668 = scalar_lea.vmem %s316, 48 [#allocation11]
        %1669 = vst.msk [vmem:[%s1668] sm:$0xff] %vm321, %v1660
        %1670 = vst.msk [vmem:[%s1668 + $0x8] sm:$0xff] %vm321, %v1665
        %s1671 = sand.u32 %s156, 1
        %s1672 = scalar_lea.sflag [#allocation4], %s1671
        %s1673 = sand.u32 %s156, 1
        %s1674 = smul.addr %s1673, 64
        %s1675 = scalar_lea.vmem [#allocation11], %s1674
        // Predicated region
        $region61: #{laplacian_pyramid.1} parent=39 // pred_check
          %p1676 = pneg %p166
        $region62: #{laplacian_pyramid.1} parent=39 // pred_check_branch
          %1678 = sbr.rel (%p1676) target = $region64
        $region63: #{laplacian_pyramid.1} parent=39 // pred_region
          #allocation13 [shape = 'u32[6]{0}', space=smem, size = 0x18, scoped, tag = 'DMA stride descriptor']
          %s1680 = ssub.s32 1024, 1024
          %1681 = vsyncadd %s1672, %s1680
          %s1682 = smul.addr %s27, 2
          %s1683 = smul.addr %s26, 24
          %s1684 = sadd.s32 %s1682, %s1683
          %s1685 = smul.addr %s1684, 128
          %s1686 = scalar_lea.hbm %s5, %s1685
          %s1688 = sshll.u32 1, 14
          %s1689 = sxor.u32 4294967295, %s1688
          %s1692 = sshll.u32 7, 18
          %s1693 = sxor.u32 4294967295, %s1692
          %s1694 = sand.u32 0, %s1693
          %s1696 = sor.u32 %s1694, 0
          %s1697 = sshll.u32 %s1675, 4
          %s1698 = int_to_ptr.vmem [resolvable:$true] %s1697
          %1704 = sst [smem:[#allocation13]] 256
          %s1705 = scalar_lea.smem [#allocation13], 1
          %1706 = sst [smem:[%s1705]] 768
          %s1707 = scalar_lea.smem [#allocation13], 2
          %1708 = sst [smem:[%s1707]] 2
          %s1709 = scalar_lea.smem [#allocation13], 3
          %1710 = sst [smem:[%s1709]] 128
          %s1711 = scalar_lea.smem [#allocation13], 4
          %1712 = sst [smem:[%s1711]] 128
          %s1713 = scalar_lea.smem [#allocation13], 5
          %1714 = sst [smem:[%s1713]] 8
          %1716 = dma.general %s1698, 1024, %s1686, %s1672, 131072, [#allocation13], %s1696, 0
        $region64: #{laplacian_pyramid.1} parent=39 // pred_fallthru
          _
      $region40: #{laplacian_pyramid.1} parent=5 // pred_fallthru
        _
      %p1717 = scmp.le.s32.totalorder 2, %s17
      // Predicated region
      $region65: #{laplacian_pyramid.1} parent=5 // pred_check
        %p1718 = pneg %p1717
      $region66: #{laplacian_pyramid.1} parent=5 // pred_check_branch
        %1720 = sbr.rel (%p1718) target = $region68
      $region67: #{laplacian_pyramid.1} parent=5 // pred_region
        %s1721 = ssub.s32 %s17, 2
        // Predicated region
        $region69: #{laplacian_pyramid.1} parent=67 // pred_check
          %p1722 = pneg %p172
        $region70: #{laplacian_pyramid.1} parent=67 // pred_check_branch
          %1724 = sbr.rel (%p1722) target = $region72
        $region71: #{laplacian_pyramid.1} parent=67 // pred_region
          %s1725 = sand.u32 %s157, 1
          %s1726 = scalar_lea.sflag [#allocation4], %s1725
          %s1727 = sand.u32 %s157, 1
          %s1728 = smul.addr %s1727, 64
          %s1729 = scalar_lea.vmem [#allocation11], %s1728
          %1730 = dma.done %s1726, 1024
        $region72: #{laplacian_pyramid.1} parent=67 // pred_fallthru
          _
      $region68: #{laplacian_pyramid.1} parent=5 // pred_fallthru
        _
    $region6: #{laplacian_pyramid.1} parent=1 // loop_footer
      %s21 = sadd.s32 1, %s17
    $region7: #{laplacian_pyramid.1} parent=1 // loop_footer_branch
      %16 = sbr.rel target = $region3
    $region8: #{laplacian_pyramid.1} parent=1 // loop_exit
      _
    %1731 = vsyncpa [#allocation3], 1
    %s1732 = scalar_lea.sflag [#allocation3], 1
    %1733 = vsyncpa %s1732, 1
    %1734 = vsyncpa [#allocation6], 1
    %1735 = vsyncpa [#allocation9], 1
    %1736 = vsyncpa [#allocation4], 1
    %s1737 = scalar_lea.sflag [#allocation4], 1
    %1738 = vsyncpa %s1737, 1

</llo_original>
